<compile_context>
chip_gen: v6e
topology: v6e:2x2x1
jax: 0.10.0
libtpu: 0.0.40
codegen_flags: <defaults>
</compile_context>

<pallas_src>
import functools

import jax
import jax.numpy as jnp
from jax.experimental import pallas as pl
from jax.experimental.pallas import tpu as pltpu

_N_TEMPLATE = 64          # SHA_Fusion hard-codes x[:, :64, :] as the template tokens
_SHA_CH = 8               # cross-attention width: nn.Linear(dim, 8)
_EPS = 1e-5               # GroupNorm / LayerNorm eps (torch defaults)

# channel_shuffle(., groups=2) on 8 channels: shuffled[:, j] = v[:, SIGMA[j]]
_SHUFFLE_SIGMA = (0, 4, 1, 5, 2, 6, 3, 7)
_SHUFFLE_INV = (0, 2, 4, 6, 1, 3, 5, 7)   # SIGMA^{-1}: fold shuffle into end_proj weight


def _attention_module_kernel(x_ref, w1_ref, b1_ref, sha_ref, w2_ref, b2_ref,
                             gamma_ref, beta_ref, o_ref, *, n_z):
    x = x_ref[0].astype(jnp.float32)                                 # (N, D) f32
    n_tok = x.shape[0]
    n_x = n_tok - n_z

    # ---- fc1 (dim -> 8) + ReLU, kept channel-major (8, N) -------------------
    y = jax.lax.dot_general(w1_ref[...], x,
                            dimension_numbers=(((1,), (1,)), ((), ())),
                            preferred_element_type=jnp.float32)      # (8, N)
    y = jnp.maximum(y + b1_ref[...], 0.0)

    # ---- ShuffleAttention gating, masked over the two token segments --------
    # sha_ref: (8, 8)  rows = channel, cols = [pa_z, pb_z, gw_z, gb_z,
    #                                          pa_x, pb_x, gw_x, gb_x]
    p = sha_ref[...]
    tok = jax.lax.broadcasted_iota(jnp.int32, (1, n_tok), 1)
    is_z = tok < n_z                                                 # (1, N)
    ch = jax.lax.broadcasted_iota(jnp.int32, (_SHA_CH, 1), 0)
    is_channel_branch = ch < (_SHA_CH // 2)                          # (8, 1)

    # single-pass per-channel, per-segment statistics (sum / sum-of-squares)
    y_z = jnp.where(is_z, y, 0.0)
    y_x = y - y_z
    mean_z = jnp.sum(y_z, axis=1, keepdims=True) * (1.0 / n_z)       # (8, 1)
    mean_x = jnp.sum(y_x, axis=1, keepdims=True) * (1.0 / n_x)
    msq_z = jnp.sum(y_z * y_z, axis=1, keepdims=True) * (1.0 / n_z)
    msq_x = jnp.sum(y_x * y_x, axis=1, keepdims=True) * (1.0 / n_x)
    rstd_z = jax.lax.rsqrt(jnp.maximum(msq_z - mean_z * mean_z, 0.0) + _EPS)
    rstd_x = jax.lax.rsqrt(jnp.maximum(msq_x - mean_x * mean_x, 0.0) + _EPS)

    # per-token segment selection of stats / parameters  -> (8, N)
    mean = jnp.where(is_z, mean_z, mean_x)
    rstd = jnp.where(is_z, rstd_z, rstd_x)
    pa = jnp.where(is_z, p[:, 0:1], p[:, 4:5])
    pb = jnp.where(is_z, p[:, 1:2], p[:, 5:6])
    gw = jnp.where(is_z, p[:, 2:3], p[:, 6:7])
    gb = jnp.where(is_z, p[:, 3:4], p[:, 7:8])

    gn = (y - mean) * rstd * gw + gb                                 # spatial branch stat
    stat = jnp.where(is_channel_branch, mean, gn)                    # channel vs spatial
    v = y * jax.nn.sigmoid(pa * stat + pb)                           # (8, N), un-shuffled

    # ---- fused end_proj over stacked channels [y; v] -------------------------
    # channel shuffle is folded into rows 8..15 of w2_ref (row permutation).
    yv = jnp.concatenate([y, v], axis=0)                             # (16, N)
    proj = jax.lax.dot_general(yv, w2_ref[...],
                               dimension_numbers=(((0,), (0,)), ((), ())),
                               preferred_element_type=jnp.float32)   # (N, D)

    # ---- residual + LayerNorm (single-pass stats) ----------------------------
    r = x + proj + b2_ref[...]
    inv_d = 1.0 / r.shape[-1]
    mu = jnp.sum(r, axis=-1, keepdims=True) * inv_d
    msq = jnp.sum(r * r, axis=-1, keepdims=True) * inv_d
    var = jnp.maximum(msq - mu * mu, 0.0)
    out = (r - mu) * jax.lax.rsqrt(var + _EPS) * gamma_ref[...] + beta_ref[...]
    o_ref[0] = out.astype(o_ref.dtype)


def _sha_param_cols(p):
    """One ShuffleAttention's params as an (8, 4) [pa, pb, gn_w, gn_b] block.

    Channels 0..3 (channel branch): pa/pb = cweight/cbias, GN affine unused (1, 0).
    Channels 4..7 (spatial branch): pa/pb = sweight/sbias, GN affine = gn_w/gn_b.
    """
    pa = jnp.concatenate([p["cweight"], p["sweight"]])
    pb = jnp.concatenate([p["cbias"], p["sbias"]])
    gw = jnp.concatenate([jnp.ones_like(p["gn_w"]), p["gn_w"]])
    gb = jnp.concatenate([jnp.zeros_like(p["gn_b"]), p["gn_b"]])
    return jnp.stack([pa, pb, gw, gb], axis=1)                       # (8, 4)


@jax.jit
def attention_module_pallas(x1, params):
    B, N, D = x1.shape
    assert N > _N_TEMPLATE, "need template (64) + at least one search token"

    w1 = params["linear_w"].astype(jnp.float32)                      # (8, D) torch layout
    b1 = params["linear_b"].reshape(_SHA_CH, 1).astype(jnp.float32)  # (8, 1) channel-major
    w2_t = params["end_w"].T.astype(jnp.float32)                     # (8, D)
    w2_v = jnp.take(w2_t, jnp.array(_SHUFFLE_INV, dtype=jnp.int32), axis=0)
    w2_stack = jnp.concatenate([w2_t, w2_v], axis=0)                 # (16, D): [y-rows; v-rows]
    b2 = params["end_b"].reshape(1, D).astype(jnp.float32)
    gamma = params["ln_w"].reshape(1, D).astype(jnp.float32)
    beta = params["ln_b"].reshape(1, D).astype(jnp.float32)
    sha_packed = jnp.concatenate(
        [_sha_param_cols(params["sha_z"]), _sha_param_cols(params["sha"])],
        axis=1).astype(jnp.float32)                                  # (8, 8)

    kernel = functools.partial(_attention_module_kernel, n_z=_N_TEMPLATE)

    elt = jnp.dtype(x1.dtype).itemsize
    flops = B * N * (2 * D * _SHA_CH + 4 * D * _SHA_CH + 12 * D + 40 * _SHA_CH)
    transcendentals = B * N * (_SHA_CH + 1) + B * 4 * _SHA_CH
    bytes_accessed = 2 * B * N * D * elt + (3 * _SHA_CH + 3) * D * 4

    # v7x: 64 MiB physical / ~32 MiB default-scoped VMEM.  Per step we hold the
    # double-buffered in/out slabs plus a few f32-wide temporaries; only raise
    # the scoped limit when the shapes actually need it.
    slab_bytes = N * D * elt
    vmem_need = 4 * slab_bytes + 6 * N * D * 4 + 256 * 1024
    compiler_kwargs = dict(dimension_semantics=("parallel",))
    if vmem_need > 16 * 1024 * 1024:
        compiler_kwargs["vmem_limit_bytes"] = int(min(64 * 1024 * 1024, 2 * vmem_need))

    out = pl.pallas_call(
        kernel,
        out_shape=jax.ShapeDtypeStruct((B, N, D), x1.dtype),
        grid_spec=pltpu.PrefetchScalarGridSpec(
            num_scalar_prefetch=0,
            grid=(B,),
            in_specs=[
                pl.BlockSpec((1, N, D), lambda b: (b, 0, 0)),            # x1 slab
                pl.BlockSpec((_SHA_CH, D), lambda b: (0, 0)),            # fc1 weight (8, D)
                pl.BlockSpec((_SHA_CH, 1), lambda b: (0, 0)),            # fc1 bias (8, 1)
                pl.BlockSpec((_SHA_CH, 2 * 4), lambda b: (0, 0)),        # SHA params (8, 8)
                pl.BlockSpec((2 * _SHA_CH, D), lambda b: (0, 0)),        # stacked end_proj weight
                pl.BlockSpec((1, D), lambda b: (0, 0)),                  # end_proj bias
                pl.BlockSpec((1, D), lambda b: (0, 0)),                  # LayerNorm gamma
                pl.BlockSpec((1, D), lambda b: (0, 0)),                  # LayerNorm beta
            ],
            out_specs=pl.BlockSpec((1, N, D), lambda b: (b, 0, 0)),
        ),
        compiler_params=pltpu.CompilerParams(**compiler_kwargs),
        cost_estimate=pl.CostEstimate(
            flops=flops, transcendentals=transcendentals,
            bytes_accessed=bytes_accessed),
    )(x1, w1, b1, sha_packed, w2_stack, b2, gamma, beta)
    return out
    # NOTE: with grid=(B,) and B ~ #TensorCores (v7x) there is only one grid
    # step per core, so DMA-in / compute / DMA-out are serialized; for such
    # deployments batch more leading-dim work per call (or token-tile the
    # projection/LN phase) to regain pipeline overlap.


# ----------------------------- pure-JAX reference -----------------------------
def _token2patch(t):
    B, Nt, C = t.shape
    hw = int(round(Nt ** 0.5))
    assert hw * hw == Nt
    return jnp.transpose(t, (0, 2, 1)).reshape(B, C, hw, hw)


def _patch2token(p):
    B, C, H, W = p.shape
    return jnp.transpose(p.reshape(B, C, H * W), (0, 2, 1))


def _shuffle_attention_ref(xp, prm):
    B, C, H, W = xp.shape
    xa, xb = xp[:, :4], xp[:, 4:]
    cw = prm["cweight"].reshape(1, 4, 1, 1)
    cb = prm["cbias"].reshape(1, 4, 1, 1)
    sw = prm["sweight"].reshape(1, 4, 1, 1)
    sb = prm["sbias"].reshape(1, 4, 1, 1)
    # channel branch
    pooled = jnp.mean(xa, axis=(2, 3), keepdims=True)
    x_channel = xa * jax.nn.sigmoid(cw * pooled + cb)
    # spatial branch: GroupNorm(4 groups, 4 channels) == per-channel norm
    mu = jnp.mean(xb, axis=(2, 3), keepdims=True)
    var = jnp.mean((xb - mu) ** 2, axis=(2, 3), keepdims=True)
    gn = (xb - mu) / jnp.sqrt(var + _EPS)
    gn = gn * prm["gn_w"].reshape(1, 4, 1, 1) + prm["gn_b"].reshape(1, 4, 1, 1)
    x_spatial = xb * jax.nn.sigmoid(sw * gn + sb)
    out = jnp.concatenate([x_channel, x_spatial], axis=1)
    # channel_shuffle(groups=2)
    out = out.reshape(B, 2, 4, H, W).transpose(0, 2, 1, 3, 4).reshape(B, 8, H, W)
    return out


def attention_module_reference(x1, params):
    y = jax.nn.relu(x1 @ params["linear_w"].T + params["linear_b"])       # (B, N, 8)
    z_v = _token2patch(y[:, :_N_TEMPLATE])
    x_v = _token2patch(y[:, _N_TEMPLATE:])
    xs = _patch2token(_shuffle_attention_ref(x_v, params["sha"]))
    zs = _patch2token(_shuffle_attention_ref(z_v, params["sha_z"]))
    v = jnp.concatenate([zs, xs], axis=1)
    y1 = y + v
    r = x1 + y1 @ params["end_w"].T + params["end_b"]
    mu = jnp.mean(r, axis=-1, keepdims=True)
    var = jnp.mean((r - mu) ** 2, axis=-1, keepdims=True)
    return (r - mu) / jnp.sqrt(var + _EPS) * params["ln_w"] + params["ln_b"]


if __name__ == "__main__":
    B = 2
    D = 128                     # model dim (lane-dense, multiple of 128)
    n_search = 16 * 16          # search-region tokens (16x16 patch grid)
    N = _N_TEMPLATE + n_search  # 64 template + 256 search = 320 tokens

    key = jax.random.PRNGKey(0)
    keys = jax.random.split(key, 10)
    x1 = jax.random.normal(keys[0], (B, N, D), jnp.float32)

    def sha_params(k):
        ks = jax.random.split(k, 6)
        return {
            "cweight": 0.5 * jax.random.normal(ks[0], (4,), jnp.float32),
            "cbias": jnp.ones((4,), jnp.float32) + 0.1 * jax.random.normal(ks[1], (4,)),
            "sweight": 0.5 * jax.random.normal(ks[2], (4,), jnp.float32),
            "sbias": jnp.ones((4,), jnp.float32) + 0.1 * jax.random.normal(ks[3], (4,)),
            "gn_w": jnp.ones((4,), jnp.float32) + 0.1 * jax.random.normal(ks[4], (4,)),
            "gn_b": 0.1 * jax.random.normal(ks[5], (4,), jnp.float32),
        }

    params = {
        "linear_w": 0.1 * jax.random.normal(keys[1], (_SHA_CH, D), jnp.float32),
        "linear_b": 0.1 * jax.random.normal(keys[2], (_SHA_CH,), jnp.float32),
        "end_w": 0.1 * jax.random.normal(keys[3], (D, _SHA_CH), jnp.float32),
        "end_b": 0.1 * jax.random.normal(keys[4], (D,), jnp.float32),
        "ln_w": jnp.ones((D,), jnp.float32) + 0.1 * jax.random.normal(keys[5], (D,)),
        "ln_b": 0.1 * jax.random.normal(keys[6], (D,), jnp.float32),
        "sha": sha_params(keys[7]),
        "sha_z": sha_params(keys[8]),
    }

    out = attention_module_pallas(x1, params)
    out = jax.block_until_ready(out)

    ref = attention_module_reference(x1, params)
    assert out.shape == (B, N, D)
    max_err = float(jnp.max(jnp.abs(out - ref)))
    assert jnp.allclose(out, ref, atol=5e-4, rtol=5e-4), f"max abs err {max_err}"

    print("KERNEL_OK")
</pallas_src>

<mosaic_0001>
module attributes {stable_mosaic.version = 11 : i64} {
  func.func @_attention_module_kernel(%arg0: i32, %arg1: memref<1x320x128xf32, #tpu.memory_space<vmem>>, %arg2: memref<8x128xf32, #tpu.memory_space<vmem>>, %arg3: memref<8x1xf32, #tpu.memory_space<vmem>>, %arg4: memref<8x8xf32, #tpu.memory_space<vmem>>, %arg5: memref<16x128xf32, #tpu.memory_space<vmem>>, %arg6: memref<1x128xf32, #tpu.memory_space<vmem>>, %arg7: memref<1x128xf32, #tpu.memory_space<vmem>>, %arg8: memref<1x128xf32, #tpu.memory_space<vmem>>, %arg9: memref<1x320x128xf32, #tpu.memory_space<vmem>>) attributes {dimension_semantics = [#tpu.dimension_semantics<parallel>], iteration_bounds = array<i64: 2>, scalar_prefetch = 0 : i64, scratch_operands = 0 : i64, tpu.core_type = #tpu.core_type<tc>, window_params = [{transform_indices = @transform_0, window_bounds = array<i64: 1, 320, 128>}, {pipeline_mode = #tpu.pipeline_mode<synchronous>, transform_indices = @transform_1, window_bounds = array<i64: 8, 128>}, {pipeline_mode = #tpu.pipeline_mode<synchronous>, transform_indices = @transform_2, window_bounds = array<i64: 8, 1>}, {pipeline_mode = #tpu.pipeline_mode<synchronous>, transform_indices = @transform_3, window_bounds = array<i64: 8, 8>}, {pipeline_mode = #tpu.pipeline_mode<synchronous>, transform_indices = @transform_4, window_bounds = array<i64: 16, 128>}, {pipeline_mode = #tpu.pipeline_mode<synchronous>, transform_indices = @transform_5, window_bounds = array<i64: 1, 128>}, {pipeline_mode = #tpu.pipeline_mode<synchronous>, transform_indices = @transform_6, window_bounds = array<i64: 1, 128>}, {pipeline_mode = #tpu.pipeline_mode<synchronous>, transform_indices = @transform_7, window_bounds = array<i64: 1, 128>}, {transform_indices = @transform_8, window_bounds = array<i64: 1, 320, 128>}]} {
    %c0 = arith.constant 0 : index
    %c0_0 = arith.constant 0 : index
    %c0_1 = arith.constant 0 : index
    %0 = vector.load %arg1[%c0, %c0_0, %c0_1] : memref<1x320x128xf32, #tpu.memory_space<vmem>>, vector<1x320x128xf32>
    %1 = vector.shape_cast %0 : vector<1x320x128xf32> to vector<320x128xf32>
    %c0_2 = arith.constant 0 : index
    %c0_3 = arith.constant 0 : index
    %2 = vector.load %arg2[%c0_2, %c0_3] : memref<8x128xf32, #tpu.memory_space<vmem>>, vector<8x128xf32>
    %cst = arith.constant dense<0.000000e+00> : vector<8x320xf32>
    %3 = tpu.matmul %2, %1, %cst {dimension_numbers = #tpu.dot_dimension_numbers<[1], [1], [0], [0], [0, 0, 1, 0], [], []>} : vector<8x128xf32>, vector<320x128xf32>, vector<8x320xf32> -> vector<8x320xf32>
    %c0_4 = arith.constant 0 : index
    %c0_5 = arith.constant 0 : index
    %4 = vector.load %arg3[%c0_4, %c0_5] : memref<8x1xf32, #tpu.memory_space<vmem>>, vector<8x1xf32>
    %5 = vector.broadcast %4 : vector<8x1xf32> to vector<8x320xf32>
    %6 = arith.addf %3, %5 : vector<8x320xf32>
    %cst_6 = arith.constant 0.000000e+00 : f32
    %7 = vector.broadcast %cst_6 : f32 to vector<8x320xf32>
    %8 = arith.maximumf %6, %7 : vector<8x320xf32>
    %c0_7 = arith.constant 0 : index
    %c0_8 = arith.constant 0 : index
    %9 = vector.load %arg4[%c0_7, %c0_8] : memref<8x8xf32, #tpu.memory_space<vmem>>, vector<8x8xf32>
    %10 = tpu.iota {dimensions = array<i32: 1>} : vector<1x320xi32>
    %c64_i32 = arith.constant 64 : i32
    %11 = vector.broadcast %c64_i32 : i32 to vector<1x320xi32>
    %12 = arith.cmpi slt, %10, %11 : vector<1x320xi32>
    %13 = tpu.iota {dimensions = array<i32: 0>} : vector<8x1xi32>
    %c4_i32 = arith.constant 4 : i32
    %14 = vector.broadcast %c4_i32 : i32 to vector<8x1xi32>
    %15 = arith.cmpi slt, %13, %14 : vector<8x1xi32>
    %cst_9 = arith.constant 0.000000e+00 : f32
    %16 = vector.shape_cast %12 : vector<1x320xi1> to vector<1x320xi1>
    %17 = vector.broadcast %16 : vector<1x320xi1> to vector<8x320xi1>
    %18 = vector.broadcast %cst_9 : f32 to vector<8x320xf32>
    %19 = arith.select %17, %8, %18 : vector<8x320xi1>, vector<8x320xf32>
    %20 = arith.subf %8, %19 : vector<8x320xf32>
    %cst_10 = arith.constant dense<0.000000e+00> : vector<8xf32>
    %21 = vector.multi_reduction <add>, %19, %cst_10 [1] : vector<8x320xf32> to vector<8xf32>
    %22 = vector.shape_cast %21 : vector<8xf32> to vector<8x1xf32>
    %cst_11 = arith.constant 1.562500e-02 : f32
    %23 = vector.broadcast %cst_11 : f32 to vector<8x1xf32>
    %24 = arith.mulf %22, %23 : vector<8x1xf32>
    %cst_12 = arith.constant dense<0.000000e+00> : vector<8xf32>
    %25 = vector.multi_reduction <add>, %20, %cst_12 [1] : vector<8x320xf32> to vector<8xf32>
    %26 = vector.shape_cast %25 : vector<8xf32> to vector<8x1xf32>
    %cst_13 = arith.constant 3.906250e-03 : f32
    %27 = vector.broadcast %cst_13 : f32 to vector<8x1xf32>
    %28 = arith.mulf %26, %27 : vector<8x1xf32>
    %29 = arith.mulf %19, %19 : vector<8x320xf32>
    %cst_14 = arith.constant dense<0.000000e+00> : vector<8xf32>
    %30 = vector.multi_reduction <add>, %29, %cst_14 [1] : vector<8x320xf32> to vector<8xf32>
    %31 = vector.shape_cast %30 : vector<8xf32> to vector<8x1xf32>
    %cst_15 = arith.constant 1.562500e-02 : f32
    %32 = vector.broadcast %cst_15 : f32 to vector<8x1xf32>
    %33 = arith.mulf %31, %32 : vector<8x1xf32>
    %34 = arith.mulf %20, %20 : vector<8x320xf32>
    %cst_16 = arith.constant dense<0.000000e+00> : vector<8xf32>
    %35 = vector.multi_reduction <add>, %34, %cst_16 [1] : vector<8x320xf32> to vector<8xf32>
    %36 = vector.shape_cast %35 : vector<8xf32> to vector<8x1xf32>
    %cst_17 = arith.constant 3.906250e-03 : f32
    %37 = vector.broadcast %cst_17 : f32 to vector<8x1xf32>
    %38 = arith.mulf %36, %37 : vector<8x1xf32>
    %39 = arith.mulf %24, %24 : vector<8x1xf32>
    %40 = arith.subf %33, %39 : vector<8x1xf32>
    %cst_18 = arith.constant 0.000000e+00 : f32
    %41 = vector.broadcast %cst_18 : f32 to vector<8x1xf32>
    %42 = arith.maximumf %40, %41 : vector<8x1xf32>
    %cst_19 = arith.constant 9.99999974E-6 : f32
    %43 = vector.broadcast %cst_19 : f32 to vector<8x1xf32>
    %44 = arith.addf %42, %43 : vector<8x1xf32>
    %45 = math.rsqrt %44 : vector<8x1xf32>
    %46 = arith.mulf %28, %28 : vector<8x1xf32>
    %47 = arith.subf %38, %46 : vector<8x1xf32>
    %cst_20 = arith.constant 0.000000e+00 : f32
    %48 = vector.broadcast %cst_20 : f32 to vector<8x1xf32>
    %49 = arith.maximumf %47, %48 : vector<8x1xf32>
    %cst_21 = arith.constant 9.99999974E-6 : f32
    %50 = vector.broadcast %cst_21 : f32 to vector<8x1xf32>
    %51 = arith.addf %49, %50 : vector<8x1xf32>
    %52 = math.rsqrt %51 : vector<8x1xf32>
    %53 = vector.shape_cast %12 : vector<1x320xi1> to vector<1x320xi1>
    %54 = vector.broadcast %53 : vector<1x320xi1> to vector<8x320xi1>
    %55 = vector.shape_cast %24 : vector<8x1xf32> to vector<8x1xf32>
    %56 = vector.broadcast %55 : vector<8x1xf32> to vector<8x320xf32>
    %57 = vector.shape_cast %28 : vector<8x1xf32> to vector<8x1xf32>
    %58 = vector.broadcast %57 : vector<8x1xf32> to vector<8x320xf32>
    %59 = arith.select %54, %56, %58 : vector<8x320xi1>, vector<8x320xf32>
    %60 = vector.shape_cast %12 : vector<1x320xi1> to vector<1x320xi1>
    %61 = vector.broadcast %60 : vector<1x320xi1> to vector<8x320xi1>
    %62 = vector.shape_cast %45 : vector<8x1xf32> to vector<8x1xf32>
    %63 = vector.broadcast %62 : vector<8x1xf32> to vector<8x320xf32>
    %64 = vector.shape_cast %52 : vector<8x1xf32> to vector<8x1xf32>
    %65 = vector.broadcast %64 : vector<8x1xf32> to vector<8x320xf32>
    %66 = arith.select %61, %63, %65 : vector<8x320xi1>, vector<8x320xf32>
    %67 = vector.extract_strided_slice %9 {offsets = [0, 0], sizes = [8, 1], strides = [1, 1]} : vector<8x8xf32> to vector<8x1xf32>
    %68 = vector.extract_strided_slice %9 {offsets = [0, 4], sizes = [8, 1], strides = [1, 1]} : vector<8x8xf32> to vector<8x1xf32>
    %69 = vector.shape_cast %12 : vector<1x320xi1> to vector<1x320xi1>
    %70 = vector.broadcast %69 : vector<1x320xi1> to vector<8x320xi1>
    %71 = vector.shape_cast %67 : vector<8x1xf32> to vector<8x1xf32>
    %72 = vector.broadcast %71 : vector<8x1xf32> to vector<8x320xf32>
    %73 = vector.shape_cast %68 : vector<8x1xf32> to vector<8x1xf32>
    %74 = vector.broadcast %73 : vector<8x1xf32> to vector<8x320xf32>
    %75 = arith.select %70, %72, %74 : vector<8x320xi1>, vector<8x320xf32>
    %76 = vector.extract_strided_slice %9 {offsets = [0, 1], sizes = [8, 1], strides = [1, 1]} : vector<8x8xf32> to vector<8x1xf32>
    %77 = vector.extract_strided_slice %9 {offsets = [0, 5], sizes = [8, 1], strides = [1, 1]} : vector<8x8xf32> to vector<8x1xf32>
    %78 = vector.shape_cast %12 : vector<1x320xi1> to vector<1x320xi1>
    %79 = vector.broadcast %78 : vector<1x320xi1> to vector<8x320xi1>
    %80 = vector.shape_cast %76 : vector<8x1xf32> to vector<8x1xf32>
    %81 = vector.broadcast %80 : vector<8x1xf32> to vector<8x320xf32>
    %82 = vector.shape_cast %77 : vector<8x1xf32> to vector<8x1xf32>
    %83 = vector.broadcast %82 : vector<8x1xf32> to vector<8x320xf32>
    %84 = arith.select %79, %81, %83 : vector<8x320xi1>, vector<8x320xf32>
    %85 = vector.extract_strided_slice %9 {offsets = [0, 2], sizes = [8, 1], strides = [1, 1]} : vector<8x8xf32> to vector<8x1xf32>
    %86 = vector.extract_strided_slice %9 {offsets = [0, 6], sizes = [8, 1], strides = [1, 1]} : vector<8x8xf32> to vector<8x1xf32>
    %87 = vector.shape_cast %12 : vector<1x320xi1> to vector<1x320xi1>
    %88 = vector.broadcast %87 : vector<1x320xi1> to vector<8x320xi1>
    %89 = vector.shape_cast %85 : vector<8x1xf32> to vector<8x1xf32>
    %90 = vector.broadcast %89 : vector<8x1xf32> to vector<8x320xf32>
    %91 = vector.shape_cast %86 : vector<8x1xf32> to vector<8x1xf32>
    %92 = vector.broadcast %91 : vector<8x1xf32> to vector<8x320xf32>
    %93 = arith.select %88, %90, %92 : vector<8x320xi1>, vector<8x320xf32>
    %94 = vector.extract_strided_slice %9 {offsets = [0, 3], sizes = [8, 1], strides = [1, 1]} : vector<8x8xf32> to vector<8x1xf32>
    %95 = vector.extract_strided_slice %9 {offsets = [0, 7], sizes = [8, 1], strides = [1, 1]} : vector<8x8xf32> to vector<8x1xf32>
    %96 = vector.shape_cast %12 : vector<1x320xi1> to vector<1x320xi1>
    %97 = vector.broadcast %96 : vector<1x320xi1> to vector<8x320xi1>
    %98 = vector.shape_cast %94 : vector<8x1xf32> to vector<8x1xf32>
    %99 = vector.broadcast %98 : vector<8x1xf32> to vector<8x320xf32>
    %100 = vector.shape_cast %95 : vector<8x1xf32> to vector<8x1xf32>
    %101 = vector.broadcast %100 : vector<8x1xf32> to vector<8x320xf32>
    %102 = arith.select %97, %99, %101 : vector<8x320xi1>, vector<8x320xf32>
    %103 = arith.subf %8, %59 : vector<8x320xf32>
    %104 = arith.mulf %103, %66 : vector<8x320xf32>
    %105 = arith.mulf %104, %93 : vector<8x320xf32>
    %106 = arith.addf %105, %102 : vector<8x320xf32>
    %107 = vector.shape_cast %15 : vector<8x1xi1> to vector<8x1xi1>
    %108 = vector.broadcast %107 : vector<8x1xi1> to vector<8x320xi1>
    %109 = arith.select %108, %59, %106 : vector<8x320xi1>, vector<8x320xf32>
    %110 = arith.mulf %75, %109 : vector<8x320xf32>
    %111 = arith.addf %110, %84 : vector<8x320xf32>
    %112 = arith.negf %111 : vector<8x320xf32>
    %113 = math.exp %112 : vector<8x320xf32>
    %cst_22 = arith.constant 1.000000e+00 : f32
    %114 = vector.broadcast %cst_22 : f32 to vector<8x320xf32>
    %115 = arith.addf %114, %113 : vector<8x320xf32>
    %116 = arith.divf %114, %115 : vector<8x320xf32>
    %117 = arith.mulf %8, %116 : vector<8x320xf32>
    %118 = tpu.concatenate %8, %117 in 0 : vector<8x320xf32>, vector<8x320xf32> -> vector<16x320xf32>
    %c0_23 = arith.constant 0 : index
    %c0_24 = arith.constant 0 : index
    %119 = vector.load %arg5[%c0_23, %c0_24] : memref<16x128xf32, #tpu.memory_space<vmem>>, vector<16x128xf32>
    %cst_25 = arith.constant dense<0.000000e+00> : vector<320x128xf32>
    %120 = tpu.matmul %118, %119, %cst_25 {dimension_numbers = #tpu.dot_dimension_numbers<[0], [0], [1], [1], [0, 1, 1, 1], [], []>} : vector<16x320xf32>, vector<16x128xf32>, vector<320x128xf32> -> vector<320x128xf32>
    %121 = arith.addf %1, %120 : vector<320x128xf32>
    %c0_26 = arith.constant 0 : index
    %c0_27 = arith.constant 0 : index
    %122 = vector.load %arg6[%c0_26, %c0_27] : memref<1x128xf32, #tpu.memory_space<vmem>>, vector<1x128xf32>
    %123 = vector.broadcast %122 : vector<1x128xf32> to vector<320x128xf32>
    %124 = arith.addf %121, %123 : vector<320x128xf32>
    %cst_28 = arith.constant dense<0.000000e+00> : vector<320xf32>
    %125 = vector.multi_reduction <add>, %124, %cst_28 [1] : vector<320x128xf32> to vector<320xf32>
    %126 = vector.shape_cast %125 : vector<320xf32> to vector<320x1xf32>
    %cst_29 = arith.constant 7.812500e-03 : f32
    %127 = vector.broadcast %cst_29 : f32 to vector<320x1xf32>
    %128 = arith.mulf %126, %127 : vector<320x1xf32>
    %129 = arith.mulf %124, %124 : vector<320x128xf32>
    %cst_30 = arith.constant dense<0.000000e+00> : vector<320xf32>
    %130 = vector.multi_reduction <add>, %129, %cst_30 [1] : vector<320x128xf32> to vector<320xf32>
    %131 = vector.shape_cast %130 : vector<320xf32> to vector<320x1xf32>
    %cst_31 = arith.constant 7.812500e-03 : f32
    %132 = vector.broadcast %cst_31 : f32 to vector<320x1xf32>
    %133 = arith.mulf %131, %132 : vector<320x1xf32>
    %134 = arith.mulf %128, %128 : vector<320x1xf32>
    %135 = arith.subf %133, %134 : vector<320x1xf32>
    %cst_32 = arith.constant 0.000000e+00 : f32
    %136 = vector.broadcast %cst_32 : f32 to vector<320x1xf32>
    %137 = arith.maximumf %135, %136 : vector<320x1xf32>
    %138 = vector.broadcast %128 : vector<320x1xf32> to vector<320x128xf32>
    %139 = arith.subf %124, %138 : vector<320x128xf32>
    %cst_33 = arith.constant 9.99999974E-6 : f32
    %140 = vector.broadcast %cst_33 : f32 to vector<320x1xf32>
    %141 = arith.addf %137, %140 : vector<320x1xf32>
    %142 = math.rsqrt %141 : vector<320x1xf32>
    %143 = vector.broadcast %142 : vector<320x1xf32> to vector<320x128xf32>
    %144 = arith.mulf %139, %143 : vector<320x128xf32>
    %c0_34 = arith.constant 0 : index
    %c0_35 = arith.constant 0 : index
    %145 = vector.load %arg7[%c0_34, %c0_35] : memref<1x128xf32, #tpu.memory_space<vmem>>, vector<1x128xf32>
    %146 = vector.broadcast %145 : vector<1x128xf32> to vector<320x128xf32>
    %147 = arith.mulf %144, %146 : vector<320x128xf32>
    %c0_36 = arith.constant 0 : index
    %c0_37 = arith.constant 0 : index
    %148 = vector.load %arg8[%c0_36, %c0_37] : memref<1x128xf32, #tpu.memory_space<vmem>>, vector<1x128xf32>
    %149 = vector.broadcast %148 : vector<1x128xf32> to vector<320x128xf32>
    %150 = arith.addf %147, %149 : vector<320x128xf32>
    %c0_38 = arith.constant 0 : index
    %c0_39 = arith.constant 0 : index
    %c0_40 = arith.constant 0 : index
    %151 = vector.load %arg9[%c0_38, %c0_39, %c0_40] : memref<1x320x128xf32, #tpu.memory_space<vmem>>, vector<1x320x128xf32>
    %152 = vector.shape_cast %151 : vector<1x320x128xf32> to vector<320x128xf32>
    %153 = vector.shape_cast %150 : vector<320x128xf32> to vector<1x320x128xf32>
    tpu.vector_store %arg9[%c0_38, %c0_39, %c0_40], %153 {strides = array<i32>} : memref<1x320x128xf32, #tpu.memory_space<vmem>>, vector<1x320x128xf32>,
    return
  }
  func.func @transform_0(%arg0: i32) -> (i32, i32, i32) {
    %c0_i32 = arith.constant 0 : i32
    %c0_i32_0 = arith.constant 0 : i32
    %c0_i32_1 = arith.constant 0 : i32
    return %arg0, %c0_i32, %c0_i32_0 : i32, i32, i32
  }
  func.func @transform_1(%arg0: i32) -> (i32, i32) {
    %c0_i32 = arith.constant 0 : i32
    %c0_i32_0 = arith.constant 0 : i32
    %c0_i32_1 = arith.constant 0 : i32
    return %c0_i32, %c0_i32_0 : i32, i32
  }
  func.func @transform_2(%arg0: i32) -> (i32, i32) {
    %c0_i32 = arith.constant 0 : i32
    %c0_i32_0 = arith.constant 0 : i32
    %c0_i32_1 = arith.constant 0 : i32
    return %c0_i32, %c0_i32_0 : i32, i32
  }
  func.func @transform_3(%arg0: i32) -> (i32, i32) {
    %c0_i32 = arith.constant 0 : i32
    %c0_i32_0 = arith.constant 0 : i32
    %c0_i32_1 = arith.constant 0 : i32
    return %c0_i32, %c0_i32_0 : i32, i32
  }
  func.func @transform_4(%arg0: i32) -> (i32, i32) {
    %c0_i32 = arith.constant 0 : i32
    %c0_i32_0 = arith.constant 0 : i32
    %c0_i32_1 = arith.constant 0 : i32
    return %c0_i32, %c0_i32_0 : i32, i32
  }
  func.func @transform_5(%arg0: i32) -> (i32, i32) {
    %c0_i32 = arith.constant 0 : i32
    %c0_i32_0 = arith.constant 0 : i32
    %c0_i32_1 = arith.constant 0 : i32
    return %c0_i32, %c0_i32_0 : i32, i32
  }
  func.func @transform_6(%arg0: i32) -> (i32, i32) {
    %c0_i32 = arith.constant 0 : i32
    %c0_i32_0 = arith.constant 0 : i32
    %c0_i32_1 = arith.constant 0 : i32
    return %c0_i32, %c0_i32_0 : i32, i32
  }
  func.func @transform_7(%arg0: i32) -> (i32, i32) {
    %c0_i32 = arith.constant 0 : i32
    %c0_i32_0 = arith.constant 0 : i32
    %c0_i32_1 = arith.constant 0 : i32
    return %c0_i32, %c0_i32_0 : i32, i32
  }
  func.func @transform_8(%arg0: i32) -> (i32, i32, i32) {
    %c0_i32 = arith.constant 0 : i32
    %c0_i32_0 = arith.constant 0 : i32
    %c0_i32_1 = arith.constant 0 : i32
    return %arg0, %c0_i32, %c0_i32_0 : i32, i32, i32
  }
}

</mosaic_0001>

<llo_original>
// kernel: attention_module_pallas.1
$region0: #{attention_module_pallas.1}
  #allocation0 [shape = 'u32[]', space=smem, size = 0x4, offset = 0x4, fixed_abs, tag = 'smem constant byte address 0x4 - core index']
  #allocation1 [shape = 'u32[144,128]{1,0:T(1,128)}', space=vmem, size = 0x12000, scoped, tag = 'internal scratch']
  %s0 = inlined_call_operand.hbm [shape: f32[2,320,128], index: 0, kind: input, shape index: {}]
  %s1 = inlined_call_operand.vmem [shape: f32[8,128], index: 1, kind: input, shape index: {}]
  %s2 = inlined_call_operand.vmem [shape: f32[8,1], index: 2, kind: input, shape index: {}]
  %s3 = inlined_call_operand.vmem [shape: f32[8,8], index: 3, kind: input, shape index: {}]
  %s4 = inlined_call_operand.vmem [shape: f32[16,128], index: 4, kind: input, shape index: {}]
  %s5 = inlined_call_operand.vmem [shape: f32[1,128], index: 5, kind: input, shape index: {}]
  %s6 = inlined_call_operand.vmem [shape: f32[1,128], index: 6, kind: input, shape index: {}]
  %s7 = inlined_call_operand.vmem [shape: f32[1,128], index: 7, kind: input, shape index: {}]
  %s8 = inlined_call_operand.hbm [shape: f32[2,320,128], index: 8, kind: output, shape index: {}]
  %s9 = sld [smem:[#allocation0]]
  $region69: #{attention_module_pallas.1} parent=0
    _
  %s11 = ssub.s32 1, %s9
  %s12 = scalar_select 0, %s11, %s9
  $region1: #{attention_module_pallas.1} parent=0
    #allocation2 [shape = 'u8[327680]{0}', space=vmem, size = 0x50000, scoped, tag = 'input window, operand 0']
    #allocation3 [shape = 's32[2]{0}', space=sflag, size = 0x8, scoped, tag = 'scoped memory for attention_module_pallas.1']
    #allocation4 [shape = 's32[2]{0}', space=sflag, size = 0x8, scoped, tag = 'scoped memory for attention_module_pallas.1']
    #allocation5 [shape = 'u8[327680]{0}', space=vmem, size = 0x50000, scoped, tag = 'output window, operand 0']
    %13 = vsyncpa [#allocation3], 0
    %s14 = scalar_lea.sflag [#allocation3], 1
    %15 = vsyncpa %s14, 0
    %16 = vsyncpa [#allocation4], 0
    %s17 = scalar_lea.sflag [#allocation4], 1
    %18 = vsyncpa %s17, 0
    loop: start=0, step=1, limit=4
    $region2: #{attention_module_pallas.1} parent=1 // loop_pre_header
      _
    $region3: #{attention_module_pallas.1} parent=1 // loop_header
      %s20 = sphi 0, %s24
      %p21 = scmp.ge.s32.totalorder %s20, 4
      %s30 = sphi 0, %s32
      %s33 = sphi 0, %s30
      %s34 = sphi 0, %s33
      %s50 = sphi 0, %s34
      %s54 = sphi 0, %s54
      %s56 = sphi 0, %s54
      %s57 = sphi 0, %s56
      %s71 = sphi 0, %s57
      %s75 = sphi 0, %s75
      %s77 = sphi 0, %s75
      %s78 = sphi 0, %s77
      %s92 = sphi 0, %s78
      %s96 = sphi 0, %s96
      %s98 = sphi 0, %s96
      %s99 = sphi 0, %s98
      %s113 = sphi 0, %s99
      %s117 = sphi 0, %s117
      %s119 = sphi 0, %s117
      %s120 = sphi 0, %s119
      %s134 = sphi 0, %s120
      %s138 = sphi 0, %s138
      %s140 = sphi 0, %s138
      %s141 = sphi 0, %s140
      %s155 = sphi 0, %s141
      %s159 = sphi 0, %s159
      %s161 = sphi 0, %s159
      %s162 = sphi 0, %s161
      %s176 = sphi 0, %s162
      %s180 = sphi 0, %s180
      %s182 = sphi 0, %s180
      %s183 = sphi 0, %s182
      %s197 = sphi 0, %s183
      %s203 = sphi 0, %s205
      %s206 = sphi 0, %s203
      %s207 = sphi 0, %s206
      %s223 = sphi 0, %s207
    $region4: #{attention_module_pallas.1} parent=1 // loop_header_branch
      %23 = sbr.rel (%p21) target = $region8
    $region5: #{attention_module_pallas.1} parent=1 // loop_body
      %s25 = ssub.s32 %s20, 1
      %s26 = ssub.s32 %s20, 2
      %s27 = sadd.s32 %s20, 1
      %s28 = ssub.s32 %s20, %s27
      %p29 = scmp.eq.s32.totalorder %s28, 0
      %s31 = sadd.s32 %s30, 1
      %s32 = scalar_select %p29, %s30, %s31
      %p35 = pneg %p29
      %p36 = scmp.eq.s32.totalorder %s20, 1
      %p37 = por %p35, %p36
      %p38 = scmp.ne.s32.totalorder %s30, %s33
      %p39 = scmp.eq.s32.totalorder %s20, 0
      %p40 = por %p38, %p39
      %p41 = scmp.ne.s32.totalorder %s30, %s33
      %p42 = scmp.eq.s32.totalorder %s25, 1
      %p43 = por %p41, %p42
      %p44 = scmp.ne.s32.totalorder %s33, %s34
      %p45 = scmp.eq.s32.totalorder %s25, 0
      %p46 = por %p44, %p45
      %p47 = scmp.ne.s32.totalorder %s33, %s34
      %p48 = scmp.eq.s32.totalorder %s26, 1
      %p49 = por %p47, %p48
      %p51 = scmp.ne.s32.totalorder %s34, %s50
      %p52 = scmp.eq.s32.totalorder %s26, 0
      %p53 = por %p51, %p52
      %s55 = sadd.s32 %s54, 1
      %p58 = scmp.eq.s32.totalorder %s20, 1
      %p59 = scmp.ne.s32.totalorder %s54, %s56
      %p60 = scmp.eq.s32.totalorder %s20, 0
      %p61 = por %p59, %p60
      %p62 = scmp.ne.s32.totalorder %s54, %s56
      %p63 = scmp.eq.s32.totalorder %s25, 1
      %p64 = por %p62, %p63
      %p65 = scmp.ne.s32.totalorder %s56, %s57
      %p66 = scmp.eq.s32.totalorder %s25, 0
      %p67 = por %p65, %p66
      %p68 = scmp.ne.s32.totalorder %s56, %s57
      %p69 = scmp.eq.s32.totalorder %s26, 1
      %p70 = por %p68, %p69
      %p72 = scmp.ne.s32.totalorder %s57, %s71
      %p73 = scmp.eq.s32.totalorder %s26, 0
      %p74 = por %p72, %p73
      %s76 = sadd.s32 %s75, 1
      %p79 = scmp.eq.s32.totalorder %s20, 1
      %p80 = scmp.ne.s32.totalorder %s75, %s77
      %p81 = scmp.eq.s32.totalorder %s20, 0
      %p82 = por %p80, %p81
      %p83 = scmp.ne.s32.totalorder %s75, %s77
      %p84 = scmp.eq.s32.totalorder %s25, 1
      %p85 = por %p83, %p84
      %p86 = scmp.ne.s32.totalorder %s77, %s78
      %p87 = scmp.eq.s32.totalorder %s25, 0
      %p88 = por %p86, %p87
      %p89 = scmp.ne.s32.totalorder %s77, %s78
      %p90 = scmp.eq.s32.totalorder %s26, 1
      %p91 = por %p89, %p90
      %p93 = scmp.ne.s32.totalorder %s78, %s92
      %p94 = scmp.eq.s32.totalorder %s26, 0
      %p95 = por %p93, %p94
      %s97 = sadd.s32 %s96, 1
      %p100 = scmp.eq.s32.totalorder %s20, 1
      %p101 = scmp.ne.s32.totalorder %s96, %s98
      %p102 = scmp.eq.s32.totalorder %s20, 0
      %p103 = por %p101, %p102
      %p104 = scmp.ne.s32.totalorder %s96, %s98
      %p105 = scmp.eq.s32.totalorder %s25, 1
      %p106 = por %p104, %p105
      %p107 = scmp.ne.s32.totalorder %s98, %s99
      %p108 = scmp.eq.s32.totalorder %s25, 0
      %p109 = por %p107, %p108
      %p110 = scmp.ne.s32.totalorder %s98, %s99
      %p111 = scmp.eq.s32.totalorder %s26, 1
      %p112 = por %p110, %p111
      %p114 = scmp.ne.s32.totalorder %s99, %s113
      %p115 = scmp.eq.s32.totalorder %s26, 0
      %p116 = por %p114, %p115
      %s118 = sadd.s32 %s117, 1
      %p121 = scmp.eq.s32.totalorder %s20, 1
      %p122 = scmp.ne.s32.totalorder %s117, %s119
      %p123 = scmp.eq.s32.totalorder %s20, 0
      %p124 = por %p122, %p123
      %p125 = scmp.ne.s32.totalorder %s117, %s119
      %p126 = scmp.eq.s32.totalorder %s25, 1
      %p127 = por %p125, %p126
      %p128 = scmp.ne.s32.totalorder %s119, %s120
      %p129 = scmp.eq.s32.totalorder %s25, 0
      %p130 = por %p128, %p129
      %p131 = scmp.ne.s32.totalorder %s119, %s120
      %p132 = scmp.eq.s32.totalorder %s26, 1
      %p133 = por %p131, %p132
      %p135 = scmp.ne.s32.totalorder %s120, %s134
      %p136 = scmp.eq.s32.totalorder %s26, 0
      %p137 = por %p135, %p136
      %s139 = sadd.s32 %s138, 1
      %p142 = scmp.eq.s32.totalorder %s20, 1
      %p143 = scmp.ne.s32.totalorder %s138, %s140
      %p144 = scmp.eq.s32.totalorder %s20, 0
      %p145 = por %p143, %p144
      %p146 = scmp.ne.s32.totalorder %s138, %s140
      %p147 = scmp.eq.s32.totalorder %s25, 1
      %p148 = por %p146, %p147
      %p149 = scmp.ne.s32.totalorder %s140, %s141
      %p150 = scmp.eq.s32.totalorder %s25, 0
      %p151 = por %p149, %p150
      %p152 = scmp.ne.s32.totalorder %s140, %s141
      %p153 = scmp.eq.s32.totalorder %s26, 1
      %p154 = por %p152, %p153
      %p156 = scmp.ne.s32.totalorder %s141, %s155
      %p157 = scmp.eq.s32.totalorder %s26, 0
      %p158 = por %p156, %p157
      %s160 = sadd.s32 %s159, 1
      %p163 = scmp.eq.s32.totalorder %s20, 1
      %p164 = scmp.ne.s32.totalorder %s159, %s161
      %p165 = scmp.eq.s32.totalorder %s20, 0
      %p166 = por %p164, %p165
      %p167 = scmp.ne.s32.totalorder %s159, %s161
      %p168 = scmp.eq.s32.totalorder %s25, 1
      %p169 = por %p167, %p168
      %p170 = scmp.ne.s32.totalorder %s161, %s162
      %p171 = scmp.eq.s32.totalorder %s25, 0
      %p172 = por %p170, %p171
      %p173 = scmp.ne.s32.totalorder %s161, %s162
      %p174 = scmp.eq.s32.totalorder %s26, 1
      %p175 = por %p173, %p174
      %p177 = scmp.ne.s32.totalorder %s162, %s176
      %p178 = scmp.eq.s32.totalorder %s26, 0
      %p179 = por %p177, %p178
      %s181 = sadd.s32 %s180, 1
      %p184 = scmp.eq.s32.totalorder %s20, 1
      %p185 = scmp.ne.s32.totalorder %s180, %s182
      %p186 = scmp.eq.s32.totalorder %s20, 0
      %p187 = por %p185, %p186
      %p188 = scmp.ne.s32.totalorder %s180, %s182
      %p189 = scmp.eq.s32.totalorder %s25, 1
      %p190 = por %p188, %p189
      %p191 = scmp.ne.s32.totalorder %s182, %s183
      %p192 = scmp.eq.s32.totalorder %s25, 0
      %p193 = por %p191, %p192
      %p194 = scmp.ne.s32.totalorder %s182, %s183
      %p195 = scmp.eq.s32.totalorder %s26, 1
      %p196 = por %p194, %p195
      %p198 = scmp.ne.s32.totalorder %s183, %s197
      %p199 = scmp.eq.s32.totalorder %s26, 0
      %p200 = por %p198, %p199
      %s201 = ssub.s32 %s20, %s27
      %p202 = scmp.eq.s32.totalorder %s201, 0
      %s204 = sadd.s32 %s203, 1
      %s205 = scalar_select %p202, %s203, %s204
      %p208 = pneg %p202
      %p209 = scmp.eq.s32.totalorder %s20, 1
      %p210 = por %p208, %p209
      %p211 = scmp.ne.s32.totalorder %s203, %s206
      %p212 = scmp.eq.s32.totalorder %s20, 0
      %p213 = por %p211, %p212
      %p214 = scmp.ne.s32.totalorder %s203, %s206
      %p215 = scmp.eq.s32.totalorder %s25, 1
      %p216 = por %p214, %p215
      %p217 = scmp.ne.s32.totalorder %s206, %s207
      %p218 = scmp.eq.s32.totalorder %s25, 0
      %p219 = por %p217, %p218
      %p220 = scmp.ne.s32.totalorder %s206, %s207
      %p221 = scmp.eq.s32.totalorder %s26, 1
      %p222 = por %p220, %p221
      %p224 = scmp.ne.s32.totalorder %s207, %s223
      %p225 = scmp.eq.s32.totalorder %s26, 0
      %p226 = por %p224, %p225
      %p227 = scmp.le.s32.totalorder 1, %s20
      %p228 = scmp.lt.s32.totalorder %s20, 3
      %p229 = pnand %p227, %p228
      %p230 = pneg %p229
      // Predicated region
      $region9: #{attention_module_pallas.1} parent=5 // pred_check
        _
      $region10: #{attention_module_pallas.1} parent=5 // pred_check_branch
        %232 = sbr.rel (%p229) target = $region12
      $region11: #{attention_module_pallas.1} parent=5 // pred_region
        %s233 = ssub.s32 %s20, 1
        // Predicated region
        $region13: #{attention_module_pallas.1} parent=11 // pred_check
          %p234 = pneg %p67
        $region14: #{attention_module_pallas.1} parent=11 // pred_check_branch
          %236 = sbr.rel (%p234) target = $region16
        $region15: #{attention_module_pallas.1} parent=11 // pred_region
          _
        $region16: #{attention_module_pallas.1} parent=11 // pred_fallthru
          _
        // Predicated region
        $region17: #{attention_module_pallas.1} parent=11 // pred_check
          %p237 = pneg %p88
        $region18: #{attention_module_pallas.1} parent=11 // pred_check_branch
          %239 = sbr.rel (%p237) target = $region20
        $region19: #{attention_module_pallas.1} parent=11 // pred_region
          _
        $region20: #{attention_module_pallas.1} parent=11 // pred_fallthru
          _
        // Predicated region
        $region21: #{attention_module_pallas.1} parent=11 // pred_check
          %p240 = pneg %p109
        $region22: #{attention_module_pallas.1} parent=11 // pred_check_branch
          %242 = sbr.rel (%p240) target = $region24
        $region23: #{attention_module_pallas.1} parent=11 // pred_region
          _
        $region24: #{attention_module_pallas.1} parent=11 // pred_fallthru
          _
        // Predicated region
        $region25: #{attention_module_pallas.1} parent=11 // pred_check
          %p243 = pneg %p130
        $region26: #{attention_module_pallas.1} parent=11 // pred_check_branch
          %245 = sbr.rel (%p243) target = $region28
        $region27: #{attention_module_pallas.1} parent=11 // pred_region
          _
        $region28: #{attention_module_pallas.1} parent=11 // pred_fallthru
          _
        // Predicated region
        $region29: #{attention_module_pallas.1} parent=11 // pred_check
          %p246 = pneg %p151
        $region30: #{attention_module_pallas.1} parent=11 // pred_check_branch
          %248 = sbr.rel (%p246) target = $region32
        $region31: #{attention_module_pallas.1} parent=11 // pred_region
          _
        $region32: #{attention_module_pallas.1} parent=11 // pred_fallthru
          _
        // Predicated region
        $region33: #{attention_module_pallas.1} parent=11 // pred_check
          %p249 = pneg %p172
        $region34: #{attention_module_pallas.1} parent=11 // pred_check_branch
          %251 = sbr.rel (%p249) target = $region36
        $region35: #{attention_module_pallas.1} parent=11 // pred_region
          _
        $region36: #{attention_module_pallas.1} parent=11 // pred_fallthru
          _
        // Predicated region
        $region37: #{attention_module_pallas.1} parent=11 // pred_check
          %p252 = pneg %p193
        $region38: #{attention_module_pallas.1} parent=11 // pred_check_branch
          %254 = sbr.rel (%p252) target = $region40
        $region39: #{attention_module_pallas.1} parent=11 // pred_region
          _
        $region40: #{attention_module_pallas.1} parent=11 // pred_fallthru
          _
      $region12: #{attention_module_pallas.1} parent=5 // pred_fallthru
        _
      %p255 = scmp.lt.s32.totalorder %s20, 2
      // Predicated region
      $region41: #{attention_module_pallas.1} parent=5 // pred_check
        %p256 = pneg %p255
      $region42: #{attention_module_pallas.1} parent=5 // pred_check_branch
        %258 = sbr.rel (%p256) target = $region44
      $region43: #{attention_module_pallas.1} parent=5 // pred_region
        // Predicated region
        $region45: #{attention_module_pallas.1} parent=43 // pred_check
          %p259 = pneg %p40
        $region46: #{attention_module_pallas.1} parent=43 // pred_check_branch
          %261 = sbr.rel (%p259) target = $region48
        $region47: #{attention_module_pallas.1} parent=43 // pred_region
          %s262 = sand.u32 %s30, 1
          %s263 = scalar_lea.sflag [#allocation3], %s262
          %s264 = sand.u32 %s30, 1
          %s265 = smul.addr %s264, 320
          %s266 = scalar_lea.vmem [#allocation2], %s265
          %s268 = ssub.s32 5120, 5120
          %269 = vsyncadd %s263, %s268
          %s270 = smul.addr %s20, 40
          %s271 = smul.addr %s270, 128
          %s272 = scalar_lea.hbm %s0, %s271
          %s273 = sshll.u32 %s266, 4
          %s274 = int_to_ptr.vmem [resolvable:$true] %s273
          %279 = dma.hbm_to_vmem [thread:$0]  %s272, 5120, %s274, %s263, 128, 128, 8
        $region48: #{attention_module_pallas.1} parent=43 // pred_fallthru
          _
      $region44: #{attention_module_pallas.1} parent=5 // pred_fallthru
        _
      %p280 = scmp.le.s32.totalorder 1, %s20
      %p281 = scmp.lt.s32.totalorder %s20, 3
      %p282 = pnand %p280, %p281
      %p283 = pneg %p282
      // Predicated region
      $region49: #{attention_module_pallas.1} parent=5 // pred_check
        _
      $region50: #{attention_module_pallas.1} parent=5 // pred_check_branch
        %285 = sbr.rel (%p282) target = $region52
      $region51: #{attention_module_pallas.1} parent=5 // pred_region
        %s286 = ssub.s32 %s20, 1
        %s287 = sand.u32 %s33, 1
        %s288 = scalar_lea.sflag [#allocation3], %s287
        %s289 = sand.u32 %s33, 1
        %s290 = smul.addr %s289, 320
        %s291 = scalar_lea.vmem [#allocation2], %s290
        // Predicated region
        $region53: #{attention_module_pallas.1} parent=51 // pred_check
          %p292 = pneg %p46
        $region54: #{attention_module_pallas.1} parent=51 // pred_check_branch
          %294 = sbr.rel (%p292) target = $region56
        $region55: #{attention_module_pallas.1} parent=51 // pred_region
          %295 = dma.done %s288, 5120
        $region56: #{attention_module_pallas.1} parent=51 // pred_fallthru
          _
        %s296 = sand.u32 %s33, 1
        %s297 = scalar_lea.sflag [#allocation3], %s296
        %s298 = sand.u32 %s33, 1
        %s299 = smul.addr %s298, 320
        %s300 = scalar_lea.vmem [#allocation2], %s299
        %p301 = pneg %p46
        %p302 = pneg %p43
        %p303 = pneg %p67
        %p304 = pneg %p64
        %p305 = pneg %p88
        %p306 = pneg %p85
        %p307 = pneg %p109
        %p308 = pneg %p106
        %p309 = pneg %p130
        %p310 = pneg %p127
        %p311 = pneg %p151
        %p312 = pneg %p148
        %p313 = pneg %p172
        %p314 = pneg %p169
        %p315 = pneg %p193
        %p316 = pneg %p190
        %p317 = pneg %p219
        %p318 = pneg %p216
        %s319 = sand.u32 %s206, 1
        %s320 = scalar_lea.sflag [#allocation4], %s319
        %s321 = sand.u32 %s206, 1
        %s322 = smul.addr %s321, 320
        %s323 = scalar_lea.vmem [#allocation5], %s322
        %v324 = vld [vmem:[%s291] sm:$0xff]
        %v325 = vld [vmem:[%s291 + $0x8] sm:$0xff]
        %v326 = vld [vmem:[%s291 + $0x10] sm:$0xff]
        %v327 = vld [vmem:[%s291 + $0x18] sm:$0xff]
        %v328 = vld [vmem:[%s291 + $0x20] sm:$0xff]
        %v329 = vld [vmem:[%s291 + $0x28] sm:$0xff]
        %v330 = vld [vmem:[%s291 + $0x30] sm:$0xff]
        %v331 = vld [vmem:[%s291 + $0x38] sm:$0xff]
        %v332 = vld [vmem:[%s291 + $0x40] sm:$0xff]
        %v333 = vld [vmem:[%s291 + $0x48] sm:$0xff]
        %v334 = vld [vmem:[%s291 + $0x50] sm:$0xff]
        %v335 = vld [vmem:[%s291 + $0x58] sm:$0xff]
        %v336 = vld [vmem:[%s291 + $0x60] sm:$0xff]
        %v337 = vld [vmem:[%s291 + $0x68] sm:$0xff]
        %v338 = vld [vmem:[%s291 + $0x70] sm:$0xff]
        %v339 = vld [vmem:[%s291 + $0x78] sm:$0xff]
        %v340 = vld [vmem:[%s291 + $0x80] sm:$0xff]
        %v341 = vld [vmem:[%s291 + $0x88] sm:$0xff]
        %v342 = vld [vmem:[%s291 + $0x90] sm:$0xff]
        %v343 = vld [vmem:[%s291 + $0x98] sm:$0xff]
        %v344 = vld [vmem:[%s291 + $0xa0] sm:$0xff]
        %v345 = vld [vmem:[%s291 + $0xa8] sm:$0xff]
        %v346 = vld [vmem:[%s291 + $0xb0] sm:$0xff]
        %v347 = vld [vmem:[%s291 + $0xb8] sm:$0xff]
        %v348 = vld [vmem:[%s291 + $0xc0] sm:$0xff]
        %v349 = vld [vmem:[%s291 + $0xc8] sm:$0xff]
        %v350 = vld [vmem:[%s291 + $0xd0] sm:$0xff]
        %v351 = vld [vmem:[%s291 + $0xd8] sm:$0xff]
        %v352 = vld [vmem:[%s291 + $0xe0] sm:$0xff]
        %v353 = vld [vmem:[%s291 + $0xe8] sm:$0xff]
        %v354 = vld [vmem:[%s291 + $0xf0] sm:$0xff]
        %v355 = vld [vmem:[%s291 + $0xf8] sm:$0xff]
        %v356 = vld [vmem:[%s291 + $0x100] sm:$0xff]
        %v357 = vld [vmem:[%s291 + $0x108] sm:$0xff]
        %v358 = vld [vmem:[%s291 + $0x110] sm:$0xff]
        %v359 = vld [vmem:[%s291 + $0x118] sm:$0xff]
        %v360 = vld [vmem:[%s291 + $0x120] sm:$0xff]
        %v361 = vld [vmem:[%s291 + $0x128] sm:$0xff]
        %v362 = vld [vmem:[%s291 + $0x130] sm:$0xff]
        %v363 = vld [vmem:[%s291 + $0x138] sm:$0xff]
        %v364 = vld [vmem:[%s1] sm:$0xff]
        %v365 = vld [vmem:[%s2] sm:$0xff]
        %367 = vset.pattern.permute.xlu0 0
        %368 = vperm.xlu0 %367, %v365
        %v369 = vpop.permute.xlu0 %368
        %371 = vmatprep.subr.mxu0 0.0
        %372 = vmatpush1.xpose.msra.mxu0 %v339
        %373 = vmatprep.subr.mxu0 0.0
        %374 = vmatpush1.xpose.msra.mxu0 %v338
        %375 = vmatprep.subr.mxu0 0.0
        %376 = vmatpush1.xpose.msra.mxu0 %v337
        %377 = vmatprep.subr.mxu0 0.0
        %378 = vmatpush1.xpose.msra.mxu0 %v336
        %379 = vmatprep.subr.mxu0 0.0
        %380 = vmatpush1.xpose.msra.mxu0 %v335
        %381 = vmatprep.subr.mxu0 0.0
        %382 = vmatpush1.xpose.msra.mxu0 %v334
        %383 = vmatprep.subr.mxu0 0.0
        %384 = vmatpush1.xpose.msra.mxu0 %v333
        %385 = vmatprep.subr.mxu0 0.0
        %386 = vmatpush1.xpose.msra.mxu0 %v332
        %387 = vmatprep.subr.mxu0 0.0
        %388 = vmatpush1.xpose.msra.mxu0 %v331
        %389 = vmatprep.subr.mxu0 0.0
        %390 = vmatpush1.xpose.msra.mxu0 %v330
        %391 = vmatprep.subr.mxu0 0.0
        %392 = vmatpush1.xpose.msra.mxu0 %v329
        %393 = vmatprep.subr.mxu0 0.0
        %394 = vmatpush1.xpose.msra.mxu0 %v328
        %395 = vmatprep.subr.mxu0 0.0
        %396 = vmatpush1.xpose.msra.mxu0 %v327
        %397 = vmatprep.subr.mxu0 0.0
        %398 = vmatpush1.xpose.msra.mxu0 %v326
        %399 = vmatprep.subr.mxu0 0.0
        %400 = vmatpush1.xpose.msra.mxu0 %v325
        %401 = vmatprep.subr.mxu0 0.0
        %402 = vmatpush1.xpose.msra.mxu0 %v324
        %403 = vmatprep.subr.mxu0 0.0
        %404 = vmatpush2.xpose.msra.mxu0 %v355
        %405 = vmatprep.subr.mxu0 0.0
        %406 = vmatpush2.xpose.msra.mxu0 %v354
        %407 = vmatprep.subr.mxu0 0.0
        %408 = vmatpush2.xpose.msra.mxu0 %v353
        %409 = vmatprep.subr.mxu0 0.0
        %410 = vmatpush2.xpose.msra.mxu0 %v352
        %411 = vmatprep.subr.mxu0 0.0
        %412 = vmatpush2.xpose.msra.mxu0 %v351
        %413 = vmatprep.subr.mxu0 0.0
        %414 = vmatpush2.xpose.msra.mxu0 %v350
        %415 = vmatprep.subr.mxu0 0.0
        %416 = vmatpush2.xpose.msra.mxu0 %v349
        %417 = vmatprep.subr.mxu0 0.0
        %418 = vmatpush2.xpose.msra.mxu0 %v348
        %419 = vmatprep.subr.mxu0 0.0
        %420 = vmatpush2.xpose.msra.mxu0 %v347
        %421 = vmatprep.subr.mxu0 0.0
        %422 = vmatpush2.xpose.msra.mxu0 %v346
        %423 = vmatprep.subr.mxu0 0.0
        %424 = vmatpush2.xpose.msra.mxu0 %v345
        %425 = vmatprep.subr.mxu0 0.0
        %426 = vmatpush2.xpose.msra.mxu0 %v344
        %427 = vmatprep.subr.mxu0 0.0
        %428 = vmatpush2.xpose.msra.mxu0 %v343
        %429 = vmatprep.subr.mxu0 0.0
        %430 = vmatpush2.xpose.msra.mxu0 %v342
        %431 = vmatprep.subr.mxu0 0.0
        %432 = vmatpush2.xpose.msra.mxu0 %v341
        %433 = vmatprep.subr.mxu0 0.0
        %434 = vmatpush2.xpose.msra.mxu0 %v340
        %435 = vmatprep.mubr.f32.mxu0 0.0
        %436 = vmatmul.mubr.f32.gmra.mxu0 %v364
        %v437 = vpop.f32.mrf.mxu0
        %v438 = vadd.f32 %v369, %v437
        %v439 = vpop.f32.mrf.mxu0
        %v440 = vadd.f32 %v369, %v439
        %441 = vdwg.mxu0
        %442 = vmatprep.subr.mxu0 0.0
        %443 = vmatpush1.xpose.msra.mxu0 0.0
        %444 = vmatprep.subr.mxu0 0.0
        %445 = vmatpush1.xpose.msra.mxu0 0.0
        %446 = vmatprep.subr.mxu0 0.0
        %447 = vmatpush1.xpose.msra.mxu0 0.0
        %448 = vmatprep.subr.mxu0 0.0
        %449 = vmatpush1.xpose.msra.mxu0 0.0
        %450 = vmatprep.subr.mxu0 0.0
        %451 = vmatpush1.xpose.msra.mxu0 0.0
        %452 = vmatprep.subr.mxu0 0.0
        %453 = vmatpush1.xpose.msra.mxu0 0.0
        %454 = vmatprep.subr.mxu0 0.0
        %455 = vmatpush1.xpose.msra.mxu0 0.0
        %456 = vmatprep.subr.mxu0 0.0
        %457 = vmatpush1.xpose.msra.mxu0 0.0
        %458 = vmatprep.subr.mxu0 0.0
        %459 = vmatpush1.xpose.msra.mxu0 %v363
        %460 = vmatprep.subr.mxu0 0.0
        %461 = vmatpush1.xpose.msra.mxu0 %v362
        %462 = vmatprep.subr.mxu0 0.0
        %463 = vmatpush1.xpose.msra.mxu0 %v361
        %464 = vmatprep.subr.mxu0 0.0
        %465 = vmatpush1.xpose.msra.mxu0 %v360
        %466 = vmatprep.subr.mxu0 0.0
        %467 = vmatpush1.xpose.msra.mxu0 %v359
        %468 = vmatprep.subr.mxu0 0.0
        %469 = vmatpush1.xpose.msra.mxu0 %v358
        %470 = vmatprep.subr.mxu0 0.0
        %471 = vmatpush1.xpose.msra.mxu0 %v357
        %472 = vmatprep.subr.mxu0 0.0
        %473 = vmatpush1.xpose.msra.mxu0 %v356
        %474 = vmatprep.subr.mxu0 0.0
        %475 = vmatpush2.xpose.msra.mxu0 0.0
        %476 = vmatprep.subr.mxu0 0.0
        %477 = vmatpush2.xpose.msra.mxu0 0.0
        %478 = vmatprep.subr.mxu0 0.0
        %479 = vmatpush2.xpose.msra.mxu0 0.0
        %480 = vmatprep.subr.mxu0 0.0
        %481 = vmatpush2.xpose.msra.mxu0 0.0
        %482 = vmatprep.subr.mxu0 0.0
        %483 = vmatpush2.xpose.msra.mxu0 0.0
        %484 = vmatprep.subr.mxu0 0.0
        %485 = vmatpush2.xpose.msra.mxu0 0.0
        %486 = vmatprep.subr.mxu0 0.0
        %487 = vmatpush2.xpose.msra.mxu0 0.0
        %488 = vmatprep.subr.mxu0 0.0
        %489 = vmatpush2.xpose.msra.mxu0 0.0
        %490 = vmatprep.subr.mxu0 0.0
        %491 = vmatpush2.xpose.msra.mxu0 0.0
        %492 = vmatprep.subr.mxu0 0.0
        %493 = vmatpush2.xpose.msra.mxu0 0.0
        %494 = vmatprep.subr.mxu0 0.0
        %495 = vmatpush2.xpose.msra.mxu0 0.0
        %496 = vmatprep.subr.mxu0 0.0
        %497 = vmatpush2.xpose.msra.mxu0 0.0
        %498 = vmatprep.subr.mxu0 0.0
        %499 = vmatpush2.xpose.msra.mxu0 0.0
        %500 = vmatprep.subr.mxu0 0.0
        %501 = vmatpush2.xpose.msra.mxu0 0.0
        %502 = vmatprep.subr.mxu0 0.0
        %503 = vmatpush2.xpose.msra.mxu0 0.0
        %504 = vmatprep.subr.mxu0 0.0
        %505 = vmatpush2.xpose.msra.mxu0 0.0
        %506 = vmatprep.mubr.f32.mxu0 0.0
        %507 = vmatmul.mubr.f32.gmra.mxu0 %v364
        %v508 = vpop.f32.mrf.mxu0
        %v509 = vadd.f32 %v369, %v508
        %v510 = vpop.f32.mrf.mxu0
        %511 = vdwg.mxu0
        %v512 = vmax.f32 %v438, 0.0
        %v513 = vmax.f32 %v440, 0.0
        %v514 = vmax.f32 %v509, 0.0
        %v515 = vld [vmem:[%s3] sm:$0xff]
        %v516 = vlaneseq
        %v517 = vand.u32 %v516, 127
        %v518 = vadd.s32 %v517, 128
        %v519 = vadd.s32 %v517, 256
        %vm520 = vcmp.lt.s32.totalorder %v517, 64
        %vm521 = vcmp.lt.s32.totalorder %v518, 64
        %vm522 = vcmp.lt.s32.totalorder %v519, 64
        %v523 = vlaneseq
        %v524 = vshrl.u32 %v523, 7
        %vm525 = vcmp.lt.s32.totalorder %v524, 4
        %v526 = vsel %vm520, 1, 0
        %v527 = vsel %vm521, 1, 0
        %v528 = vsel %vm522, 1, 0
        %vm529 = vcmp.eq.s32.totalorder %v526, 1
        %vm530 = vcmp.eq.s32.totalorder %v527, 1
        %vm531 = vcmp.eq.s32.totalorder %v528, 1
        %v532 = vsel %vm529, %v512, 0.0
        %v533 = vsel %vm530, %v513, 0.0
        %v534 = vsel %vm531, %v514, 0.0
        %v535 = vsub.f32 %v512, %v532
        %v536 = vsub.f32 %v513, %v533
        %v537 = vsub.f32 %v514, %v534
        %v538 = vadd.f32 %v532, %v533
        %vm539 = vcmask 523264
        %v540 = vsel %vm539, %v534, 0.0
        %v541 = vadd.f32 %v538, %v540
        %542 = vadd.xlane.f32.xlu0 %v541
        %v543 = vpop.xlane.xlu0 %542
        %v544 = vmul.f32 %v543, 0.015625
        %v545 = vadd.f32 %v535, %v536
        %v546 = vsel %vm539, %v537, 0.0
        %v547 = vadd.f32 %v545, %v546
        %548 = vadd.xlane.f32.xlu0 %v547
        %v549 = vpop.xlane.xlu0 %548
        %v550 = vmul.f32 %v549, 0.00390625
        %v551 = vmul.f32 %v532, %v532
        %v552 = vmul.f32 %v533, %v533
        %v553 = vmul.f32 %v534, %v534
        %v554 = vadd.f32 %v551, %v552
        %v555 = vsel %vm539, %v553, 0.0
        %v556 = vadd.f32 %v554, %v555
        %557 = vadd.xlane.f32.xlu0 %v556
        %v558 = vpop.xlane.xlu0 %557
        %v559 = vmul.f32 %v558, 0.015625
        %v560 = vmul.f32 %v535, %v535
        %v561 = vmul.f32 %v536, %v536
        %v562 = vmul.f32 %v537, %v537
        %v563 = vadd.f32 %v560, %v561
        %v564 = vsel %vm539, %v562, 0.0
        %v565 = vadd.f32 %v563, %v564
        %566 = vadd.xlane.f32.xlu0 %v565
        %v567 = vpop.xlane.xlu0 %566
        %v568 = vmul.f32 %v567, 0.00390625
        %v569 = vmul.f32 %v544, %v544
        %v570 = vsub.f32 %v559, %v569
        %v571 = vmax.f32 %v570, 0.0
        %v572 = vadd.f32 %v571, 1e-05
        %v573 = vrsqrt.pop %v572
        %v574 = vmul.f32 %v550, %v550
        %v575 = vsub.f32 %v568, %v574
        %v576 = vmax.f32 %v575, 0.0
        %v577 = vadd.f32 %v576, 1e-05
        %v578 = vrsqrt.pop %v577
        %v579 = vsel %vm529, %v544, %v550
        %v580 = vsel %vm530, %v544, %v550
        %v581 = vsel %vm531, %v544, %v550
        %v582 = vsel %vm529, %v573, %v578
        %v583 = vsel %vm530, %v573, %v578
        %v584 = vsel %vm531, %v573, %v578
        %586 = vset.pattern.permute.xlu0 0
        %587 = vperm.xlu0 %586, %v515
        %v588 = vpop.permute.xlu0 %587
        %590 = vset.pattern.permute.xlu0 4
        %591 = vperm.xlu0 %590, %v515
        %v592 = vpop.permute.xlu0 %591
        %v594 = vsel %vm529, %v588, %v592
        %v595 = vsel %vm530, %v588, %v592
        %v596 = vsel %vm531, %v588, %v592
        %597 = vset.pattern.permute.xlu0 1
        %598 = vperm.xlu0 %597, %v515
        %v599 = vpop.permute.xlu0 %598
        %601 = vset.pattern.permute.xlu0 5
        %602 = vperm.xlu0 %601, %v515
        %v603 = vpop.permute.xlu0 %602
        %v605 = vsel %vm529, %v599, %v603
        %v606 = vsel %vm530, %v599, %v603
        %v607 = vsel %vm531, %v599, %v603
        %608 = vset.pattern.permute.xlu0 2
        %609 = vperm.xlu0 %608, %v515
        %v610 = vpop.permute.xlu0 %609
        %612 = vset.pattern.permute.xlu0 6
        %613 = vperm.xlu0 %612, %v515
        %v614 = vpop.permute.xlu0 %613
        %v616 = vsel %vm529, %v610, %v614
        %v617 = vsel %vm530, %v610, %v614
        %v618 = vsel %vm531, %v610, %v614
        %619 = vset.pattern.permute.xlu0 3
        %620 = vperm.xlu0 %619, %v515
        %v621 = vpop.permute.xlu0 %620
        %623 = vset.pattern.permute.xlu0 7
        %624 = vperm.xlu0 %623, %v515
        %v625 = vpop.permute.xlu0 %624
        %v627 = vsel %vm529, %v621, %v625
        %v628 = vsel %vm530, %v621, %v625
        %v629 = vsel %vm531, %v621, %v625
        %v630 = vsub.f32 %v512, %v579
        %v631 = vsub.f32 %v513, %v580
        %v632 = vsub.f32 %v514, %v581
        %v633 = vmul.f32 %v630, %v582
        %v634 = vmul.f32 %v631, %v583
        %v635 = vmul.f32 %v632, %v584
        %v636 = vmul.f32 %v633, %v616
        %v637 = vmul.f32 %v634, %v617
        %v638 = vmul.f32 %v635, %v618
        %v639 = vadd.f32 %v636, %v627
        %v640 = vadd.f32 %v637, %v628
        %v641 = vadd.f32 %v638, %v629
        %v642 = vsel %vm525, 1, 0
        %vm643 = vcmp.eq.s32.totalorder %v642, 1
        %v644 = vsel %vm643, %v579, %v639
        %v645 = vsel %vm643, %v580, %v640
        %v646 = vsel %vm643, %v581, %v641
        %v647 = vmul.f32 %v594, %v644
        %v648 = vmul.f32 %v595, %v645
        %v649 = vmul.f32 %v596, %v646
        %v650 = vadd.f32 %v647, %v605
        %v651 = vadd.f32 %v648, %v606
        %v652 = vadd.f32 %v649, %v607
        %v653 = vxor.u32 %v650, 2147483648
        %v654 = vxor.u32 %v651, 2147483648
        %v655 = vxor.u32 %v652, 2147483648
        %v656 = vmul.f32 %v653, 1.442695
        %v657 = vpow.pop %v656
        %v658 = vmul.f32 %v654, 1.442695
        %v659 = vpow.pop %v658
        %v660 = vmul.f32 %v655, 1.442695
        %v661 = vpow.pop %v660
        %v662 = vadd.f32 %v657, 1.0
        %v663 = vadd.f32 %v659, 1.0
        %v664 = vadd.f32 %v661, 1.0
        %v665 = vrcp.pop %v662
        %v666 = vmul.f32 1.0, %v665
        %v667 = vrcp.pop %v663
        %v668 = vmul.f32 1.0, %v667
        %v669 = vrcp.pop %v664
        %v670 = vmul.f32 1.0, %v669
        %v671 = vmul.f32 %v512, %v666
        %v672 = vmul.f32 %v513, %v668
        %v673 = vmul.f32 %v514, %v670
        %v674 = vld [vmem:[%s4] sm:$0xff]
        %v675 = vld [vmem:[%s4 + $0x8] sm:$0xff]
        %676 = vxpose.xlu0.b32.start [1/16] %v512, 128
        %677 = vxpose.xlu0.b32.cont [2/16] %v671, 128
        %678 = vxpose.xlu0.b32.cont [3/16] 0.0, 128
        %679 = vxpose.xlu0.b32.cont [4/16] 0.0, 128
        %680 = vxpose.xlu0.b32.cont [5/16] 0.0, 128
        %681 = vxpose.xlu0.b32.cont [6/16] 0.0, 128
        %682 = vxpose.xlu0.b32.cont [7/16] 0.0, 128
        %683 = vxpose.xlu0.b32.cont [8/16] 0.0, 128
        %684 = vxpose.xlu0.b32.cont [9/16] 0.0, 128
        %685 = vxpose.xlu0.b32.cont [10/16] 0.0, 128
        %686 = vxpose.xlu0.b32.cont [11/16] 0.0, 128
        %687 = vxpose.xlu0.b32.cont [12/16] 0.0, 128
        %688 = vxpose.xlu0.b32.cont [13/16] 0.0, 128
        %689 = vxpose.xlu0.b32.cont [14/16] 0.0, 128
        %690 = vxpose.xlu0.b32.cont [15/16] 0.0, 128
        %691 = vxpose.xlu0.b32.end [16/16] 0.0, 128
        %v692 = vpop.trf.xlu0
        %v693 = vpop.trf.xlu0
        %v694 = vpop.trf.xlu0
        %v695 = vpop.trf.xlu0
        %v696 = vpop.trf.xlu0
        %v697 = vpop.trf.xlu0
        %v698 = vpop.trf.xlu0
        %v699 = vpop.trf.xlu0
        %v700 = vpop.trf.xlu0
        %v701 = vpop.trf.xlu0
        %v702 = vpop.trf.xlu0
        %v703 = vpop.trf.xlu0
        %v704 = vpop.trf.xlu0
        %v705 = vpop.trf.xlu0
        %v706 = vpop.trf.xlu0
        %v707 = vpop.trf.xlu0
        %708 = vxpose.xlu0.b32.start [1/16] %v513, 128
        %709 = vxpose.xlu0.b32.cont [2/16] %v672, 128
        %710 = vxpose.xlu0.b32.cont [3/16] 0.0, 128
        %711 = vxpose.xlu0.b32.cont [4/16] 0.0, 128
        %712 = vxpose.xlu0.b32.cont [5/16] 0.0, 128
        %713 = vxpose.xlu0.b32.cont [6/16] 0.0, 128
        %714 = vxpose.xlu0.b32.cont [7/16] 0.0, 128
        %715 = vxpose.xlu0.b32.cont [8/16] 0.0, 128
        %716 = vxpose.xlu0.b32.cont [9/16] 0.0, 128
        %717 = vxpose.xlu0.b32.cont [10/16] 0.0, 128
        %718 = vxpose.xlu0.b32.cont [11/16] 0.0, 128
        %719 = vxpose.xlu0.b32.cont [12/16] 0.0, 128
        %720 = vxpose.xlu0.b32.cont [13/16] 0.0, 128
        %721 = vxpose.xlu0.b32.cont [14/16] 0.0, 128
        %722 = vxpose.xlu0.b32.cont [15/16] 0.0, 128
        %723 = vxpose.xlu0.b32.end [16/16] 0.0, 128
        %v724 = vpop.trf.xlu0
        %v725 = vpop.trf.xlu0
        %v726 = vpop.trf.xlu0
        %v727 = vpop.trf.xlu0
        %v728 = vpop.trf.xlu0
        %v729 = vpop.trf.xlu0
        %v730 = vpop.trf.xlu0
        %v731 = vpop.trf.xlu0
        %v732 = vpop.trf.xlu0
        %v733 = vpop.trf.xlu0
        %v734 = vpop.trf.xlu0
        %v735 = vpop.trf.xlu0
        %v736 = vpop.trf.xlu0
        %v737 = vpop.trf.xlu0
        %v738 = vpop.trf.xlu0
        %v739 = vpop.trf.xlu0
        %740 = vxpose.xlu0.b32.start [1/16] %v514, 128
        %741 = vxpose.xlu0.b32.cont [2/16] %v673, 128
        %742 = vxpose.xlu0.b32.cont [3/16] 0.0, 128
        %743 = vxpose.xlu0.b32.cont [4/16] 0.0, 128
        %744 = vxpose.xlu0.b32.cont [5/16] 0.0, 128
        %745 = vxpose.xlu0.b32.cont [6/16] 0.0, 128
        %746 = vxpose.xlu0.b32.cont [7/16] 0.0, 128
        %747 = vxpose.xlu0.b32.cont [8/16] 0.0, 128
        %748 = vxpose.xlu0.b32.cont [9/16] 0.0, 128
        %749 = vxpose.xlu0.b32.cont [10/16] 0.0, 128
        %750 = vxpose.xlu0.b32.cont [11/16] 0.0, 128
        %751 = vxpose.xlu0.b32.cont [12/16] 0.0, 128
        %752 = vxpose.xlu0.b32.cont [13/16] 0.0, 128
        %753 = vxpose.xlu0.b32.cont [14/16] 0.0, 128
        %754 = vxpose.xlu0.b32.cont [15/16] 0.0, 128
        %755 = vxpose.xlu0.b32.end [16/16] 0.0, 128
        %v756 = vpop.trf.xlu0
        %v757 = vpop.trf.xlu0
        %v758 = vpop.trf.xlu0
        %v759 = vpop.trf.xlu0
        %v760 = vpop.trf.xlu0
        %v761 = vpop.trf.xlu0
        %v762 = vpop.trf.xlu0
        %v763 = vpop.trf.xlu0
        %v764 = vpop.trf.xlu0
        %v765 = vpop.trf.xlu0
        %v766 = vpop.trf.xlu0
        %v767 = vpop.trf.xlu0
        %v768 = vpop.trf.xlu0
        %v769 = vpop.trf.xlu0
        %v770 = vpop.trf.xlu0
        %v771 = vpop.trf.xlu0
        %vm772 = vcmask 130048
        %v774 = vsel %vm772, %v692, 0
        %v777 = vsel %vm772, %v693, 0
        %v780 = vsel %vm772, %v694, 0
        %v783 = vsel %vm772, %v695, 0
        %v786 = vsel %vm772, %v696, 0
        %v789 = vsel %vm772, %v697, 0
        %v792 = vsel %vm772, %v698, 0
        %v795 = vsel %vm772, %v699, 0
        %v798 = vsel %vm772, %v700, 0
        %v801 = vsel %vm772, %v701, 0
        %v804 = vsel %vm772, %v702, 0
        %v807 = vsel %vm772, %v703, 0
        %v810 = vsel %vm772, %v704, 0
        %v813 = vsel %vm772, %v705, 0
        %v816 = vsel %vm772, %v706, 0
        %v819 = vsel %vm772, %v707, 0
        %v822 = vsel %vm772, %v724, 0
        %v825 = vsel %vm772, %v725, 0
        %v828 = vsel %vm772, %v726, 0
        %v831 = vsel %vm772, %v727, 0
        %v834 = vsel %vm772, %v728, 0
        %v837 = vsel %vm772, %v729, 0
        %v840 = vsel %vm772, %v730, 0
        %v843 = vsel %vm772, %v731, 0
        %v846 = vsel %vm772, %v732, 0
        %v849 = vsel %vm772, %v733, 0
        %v852 = vsel %vm772, %v734, 0
        %v855 = vsel %vm772, %v735, 0
        %v858 = vsel %vm772, %v736, 0
        %v861 = vsel %vm772, %v737, 0
        %v864 = vsel %vm772, %v738, 0
        %v867 = vsel %vm772, %v739, 0
        %v870 = vsel %vm772, %v756, 0
        %v873 = vsel %vm772, %v757, 0
        %v876 = vsel %vm772, %v758, 0
        %v879 = vsel %vm772, %v759, 0
        %v882 = vsel %vm772, %v760, 0
        %v885 = vsel %vm772, %v761, 0
        %v888 = vsel %vm772, %v762, 0
        %v891 = vsel %vm772, %v763, 0
        %893 = vmatprep.subr.mxu0 0.0
        %894 = vmatpush1.msra.mxu0 0.0
        %895 = vmatprep.subr.mxu0 0.0
        %896 = vmatpush1.msra.mxu0 0.0
        %897 = vmatprep.subr.mxu0 0.0
        %898 = vmatpush1.msra.mxu0 0.0
        %899 = vmatprep.subr.mxu0 0.0
        %900 = vmatpush1.msra.mxu0 0.0
        %901 = vmatprep.subr.mxu0 0.0
        %902 = vmatpush1.msra.mxu0 0.0
        %903 = vmatprep.subr.mxu0 0.0
        %904 = vmatpush1.msra.mxu0 0.0
        %905 = vmatprep.subr.mxu0 0.0
        %906 = vmatpush1.msra.mxu0 0.0
        %907 = vmatprep.subr.mxu0 0.0
        %908 = vmatpush1.msra.mxu0 0.0
        %909 = vmatprep.subr.mxu0 0.0
        %910 = vmatpush1.msra.mxu0 0.0
        %911 = vmatprep.subr.mxu0 0.0
        %912 = vmatpush1.msra.mxu0 0.0
        %913 = vmatprep.subr.mxu0 0.0
        %914 = vmatpush1.msra.mxu0 0.0
        %915 = vmatprep.subr.mxu0 0.0
        %916 = vmatpush1.msra.mxu0 0.0
        %917 = vmatprep.subr.mxu0 0.0
        %918 = vmatpush1.msra.mxu0 0.0
        %919 = vmatprep.subr.mxu0 0.0
        %920 = vmatpush1.msra.mxu0 0.0
        %921 = vmatprep.subr.mxu0 0.0
        %922 = vmatpush1.msra.mxu0 %v675
        %923 = vmatprep.subr.mxu0 0.0
        %924 = vmatpush1.msra.mxu0 %v674
        %925 = vmatprep.subr.mxu0 0.0
        %926 = vmatpush2.msra.mxu0 0.0
        %927 = vmatprep.subr.mxu0 0.0
        %928 = vmatpush2.msra.mxu0 0.0
        %929 = vmatprep.subr.mxu0 0.0
        %930 = vmatpush2.msra.mxu0 0.0
        %931 = vmatprep.subr.mxu0 0.0
        %932 = vmatpush2.msra.mxu0 0.0
        %933 = vmatprep.subr.mxu0 0.0
        %934 = vmatpush2.msra.mxu0 0.0
        %935 = vmatprep.subr.mxu0 0.0
        %936 = vmatpush2.msra.mxu0 0.0
        %937 = vmatprep.subr.mxu0 0.0
        %938 = vmatpush2.msra.mxu0 0.0
        %939 = vmatprep.subr.mxu0 0.0
        %940 = vmatpush2.msra.mxu0 0.0
        %941 = vmatprep.subr.mxu0 0.0
        %942 = vmatpush2.msra.mxu0 0.0
        %943 = vmatprep.subr.mxu0 0.0
        %944 = vmatpush2.msra.mxu0 0.0
        %945 = vmatprep.subr.mxu0 0.0
        %946 = vmatpush2.msra.mxu0 0.0
        %947 = vmatprep.subr.mxu0 0.0
        %948 = vmatpush2.msra.mxu0 0.0
        %949 = vmatprep.subr.mxu0 0.0
        %950 = vmatpush2.msra.mxu0 0.0
        %951 = vmatprep.subr.mxu0 0.0
        %952 = vmatpush2.msra.mxu0 0.0
        %953 = vmatprep.subr.mxu0 0.0
        %954 = vmatpush2.msra.mxu0 0.0
        %955 = vmatprep.subr.mxu0 0.0
        %956 = vmatpush2.msra.mxu0 0.0
        %957 = vmatprep.mubr.f32.mxu0 0.0
        %958 = vmatmul.mubr.f32.gmra.mxu0 %v774
        %v959 = vpop.f32.mrf.mxu0
        %v960 = vadd.f32 0.0, %v959
        %v961 = vpop.f32.mrf.mxu0
        %962 = vmatprep.mubr.f32.mxu0 0.0
        %963 = vmatmul.mubr.f32.gmra.mxu0 %v777
        %v964 = vpop.f32.mrf.mxu0
        %v965 = vadd.f32 0.0, %v964
        %v966 = vpop.f32.mrf.mxu0
        %967 = vmatprep.mubr.f32.mxu0 0.0
        %968 = vmatmul.mubr.f32.gmra.mxu0 %v780
        %v969 = vpop.f32.mrf.mxu0
        %v970 = vadd.f32 0.0, %v969
        %v971 = vpop.f32.mrf.mxu0
        %972 = vmatprep.mubr.f32.mxu0 0.0
        %973 = vmatmul.mubr.f32.gmra.mxu0 %v783
        %v974 = vpop.f32.mrf.mxu0
        %v975 = vadd.f32 0.0, %v974
        %v976 = vpop.f32.mrf.mxu0
        %977 = vmatprep.mubr.f32.mxu0 0.0
        %978 = vmatmul.mubr.f32.gmra.mxu0 %v786
        %v979 = vpop.f32.mrf.mxu0
        %v980 = vadd.f32 0.0, %v979
        %v981 = vpop.f32.mrf.mxu0
        %982 = vmatprep.mubr.f32.mxu0 0.0
        %983 = vmatmul.mubr.f32.gmra.mxu0 %v789
        %v984 = vpop.f32.mrf.mxu0
        %v985 = vadd.f32 0.0, %v984
        %v986 = vpop.f32.mrf.mxu0
        %987 = vmatprep.mubr.f32.mxu0 0.0
        %988 = vmatmul.mubr.f32.gmra.mxu0 %v792
        %v989 = vpop.f32.mrf.mxu0
        %v990 = vadd.f32 0.0, %v989
        %v991 = vpop.f32.mrf.mxu0
        %992 = vmatprep.mubr.f32.mxu0 0.0
        %993 = vmatmul.mubr.f32.gmra.mxu0 %v795
        %v994 = vpop.f32.mrf.mxu0
        %v995 = vadd.f32 0.0, %v994
        %v996 = vpop.f32.mrf.mxu0
        %997 = vmatprep.mubr.f32.mxu0 0.0
        %998 = vmatmul.mubr.f32.gmra.mxu0 %v798
        %v999 = vpop.f32.mrf.mxu0
        %v1000 = vadd.f32 0.0, %v999
        %v1001 = vpop.f32.mrf.mxu0
        %1002 = vmatprep.mubr.f32.mxu0 0.0
        %1003 = vmatmul.mubr.f32.gmra.mxu0 %v801
        %v1004 = vpop.f32.mrf.mxu0
        %v1005 = vadd.f32 0.0, %v1004
        %v1006 = vpop.f32.mrf.mxu0
        %1007 = vmatprep.mubr.f32.mxu0 0.0
        %1008 = vmatmul.mubr.f32.gmra.mxu0 %v804
        %v1009 = vpop.f32.mrf.mxu0
        %v1010 = vadd.f32 0.0, %v1009
        %v1011 = vpop.f32.mrf.mxu0
        %1012 = vmatprep.mubr.f32.mxu0 0.0
        %1013 = vmatmul.mubr.f32.gmra.mxu0 %v807
        %v1014 = vpop.f32.mrf.mxu0
        %v1015 = vadd.f32 0.0, %v1014
        %v1016 = vpop.f32.mrf.mxu0
        %1017 = vmatprep.mubr.f32.mxu0 0.0
        %1018 = vmatmul.mubr.f32.gmra.mxu0 %v810
        %v1019 = vpop.f32.mrf.mxu0
        %v1020 = vadd.f32 0.0, %v1019
        %v1021 = vpop.f32.mrf.mxu0
        %1022 = vmatprep.mubr.f32.mxu0 0.0
        %1023 = vmatmul.mubr.f32.gmra.mxu0 %v813
        %v1024 = vpop.f32.mrf.mxu0
        %v1025 = vadd.f32 0.0, %v1024
        %v1026 = vpop.f32.mrf.mxu0
        %1027 = vmatprep.mubr.f32.mxu0 0.0
        %1028 = vmatmul.mubr.f32.gmra.mxu0 %v816
        %v1029 = vpop.f32.mrf.mxu0
        %v1030 = vadd.f32 0.0, %v1029
        %v1031 = vpop.f32.mrf.mxu0
        %1032 = vmatprep.mubr.f32.mxu0 0.0
        %1033 = vmatmul.mubr.f32.gmra.mxu0 %v819
        %v1034 = vpop.f32.mrf.mxu0
        %v1035 = vadd.f32 0.0, %v1034
        %v1036 = vpop.f32.mrf.mxu0
        %1037 = vmatprep.mubr.f32.mxu0 0.0
        %1038 = vmatmul.mubr.f32.gmra.mxu0 %v822
        %v1039 = vpop.f32.mrf.mxu0
        %v1040 = vadd.f32 0.0, %v1039
        %v1041 = vpop.f32.mrf.mxu0
        %1042 = vmatprep.mubr.f32.mxu0 0.0
        %1043 = vmatmul.mubr.f32.gmra.mxu0 %v825
        %v1044 = vpop.f32.mrf.mxu0
        %v1045 = vadd.f32 0.0, %v1044
        %v1046 = vpop.f32.mrf.mxu0
        %1047 = vmatprep.mubr.f32.mxu0 0.0
        %1048 = vmatmul.mubr.f32.gmra.mxu0 %v828
        %v1049 = vpop.f32.mrf.mxu0
        %v1050 = vadd.f32 0.0, %v1049
        %v1051 = vpop.f32.mrf.mxu0
        %1052 = vmatprep.mubr.f32.mxu0 0.0
        %1053 = vmatmul.mubr.f32.gmra.mxu0 %v831
        %v1054 = vpop.f32.mrf.mxu0
        %v1055 = vadd.f32 0.0, %v1054
        %v1056 = vpop.f32.mrf.mxu0
        %1057 = vmatprep.mubr.f32.mxu0 0.0
        %1058 = vmatmul.mubr.f32.gmra.mxu0 %v834
        %v1059 = vpop.f32.mrf.mxu0
        %v1060 = vadd.f32 0.0, %v1059
        %v1061 = vpop.f32.mrf.mxu0
        %1062 = vmatprep.mubr.f32.mxu0 0.0
        %1063 = vmatmul.mubr.f32.gmra.mxu0 %v837
        %v1064 = vpop.f32.mrf.mxu0
        %v1065 = vadd.f32 0.0, %v1064
        %v1066 = vpop.f32.mrf.mxu0
        %1067 = vmatprep.mubr.f32.mxu0 0.0
        %1068 = vmatmul.mubr.f32.gmra.mxu0 %v840
        %v1069 = vpop.f32.mrf.mxu0
        %v1070 = vadd.f32 0.0, %v1069
        %v1071 = vpop.f32.mrf.mxu0
        %1072 = vmatprep.mubr.f32.mxu0 0.0
        %1073 = vmatmul.mubr.f32.gmra.mxu0 %v843
        %v1074 = vpop.f32.mrf.mxu0
        %v1075 = vadd.f32 0.0, %v1074
        %v1076 = vpop.f32.mrf.mxu0
        %1077 = vmatprep.mubr.f32.mxu0 0.0
        %1078 = vmatmul.mubr.f32.gmra.mxu0 %v846
        %v1079 = vpop.f32.mrf.mxu0
        %v1080 = vadd.f32 0.0, %v1079
        %v1081 = vpop.f32.mrf.mxu0
        %1082 = vmatprep.mubr.f32.mxu0 0.0
        %1083 = vmatmul.mubr.f32.gmra.mxu0 %v849
        %v1084 = vpop.f32.mrf.mxu0
        %v1085 = vadd.f32 0.0, %v1084
        %v1086 = vpop.f32.mrf.mxu0
        %1087 = vmatprep.mubr.f32.mxu0 0.0
        %1088 = vmatmul.mubr.f32.gmra.mxu0 %v852
        %v1089 = vpop.f32.mrf.mxu0
        %v1090 = vadd.f32 0.0, %v1089
        %v1091 = vpop.f32.mrf.mxu0
        %1092 = vmatprep.mubr.f32.mxu0 0.0
        %1093 = vmatmul.mubr.f32.gmra.mxu0 %v855
        %v1094 = vpop.f32.mrf.mxu0
        %v1095 = vadd.f32 0.0, %v1094
        %v1096 = vpop.f32.mrf.mxu0
        %1097 = vmatprep.mubr.f32.mxu0 0.0
        %1098 = vmatmul.mubr.f32.gmra.mxu0 %v858
        %v1099 = vpop.f32.mrf.mxu0
        %v1100 = vadd.f32 0.0, %v1099
        %v1101 = vpop.f32.mrf.mxu0
        %1102 = vmatprep.mubr.f32.mxu0 0.0
        %1103 = vmatmul.mubr.f32.gmra.mxu0 %v861
        %v1104 = vpop.f32.mrf.mxu0
        %v1105 = vadd.f32 0.0, %v1104
        %v1106 = vpop.f32.mrf.mxu0
        %1107 = vmatprep.mubr.f32.mxu0 0.0
        %1108 = vmatmul.mubr.f32.gmra.mxu0 %v864
        %v1109 = vpop.f32.mrf.mxu0
        %v1110 = vadd.f32 0.0, %v1109
        %v1111 = vpop.f32.mrf.mxu0
        %1112 = vmatprep.mubr.f32.mxu0 0.0
        %1113 = vmatmul.mubr.f32.gmra.mxu0 %v867
        %v1114 = vpop.f32.mrf.mxu0
        %v1115 = vadd.f32 0.0, %v1114
        %v1116 = vpop.f32.mrf.mxu0
        %1117 = vmatprep.mubr.f32.mxu0 0.0
        %1118 = vmatmul.mubr.f32.gmra.mxu0 %v870
        %v1119 = vpop.f32.mrf.mxu0
        %v1120 = vadd.f32 0.0, %v1119
        %v1121 = vpop.f32.mrf.mxu0
        %1122 = vmatprep.mubr.f32.mxu0 0.0
        %1123 = vmatmul.mubr.f32.gmra.mxu0 %v873
        %v1124 = vpop.f32.mrf.mxu0
        %v1125 = vadd.f32 0.0, %v1124
        %v1126 = vpop.f32.mrf.mxu0
        %1127 = vmatprep.mubr.f32.mxu0 0.0
        %1128 = vmatmul.mubr.f32.gmra.mxu0 %v876
        %v1129 = vpop.f32.mrf.mxu0
        %v1130 = vadd.f32 0.0, %v1129
        %v1131 = vpop.f32.mrf.mxu0
        %1132 = vmatprep.mubr.f32.mxu0 0.0
        %1133 = vmatmul.mubr.f32.gmra.mxu0 %v879
        %v1134 = vpop.f32.mrf.mxu0
        %v1135 = vadd.f32 0.0, %v1134
        %v1136 = vpop.f32.mrf.mxu0
        %1137 = vmatprep.mubr.f32.mxu0 0.0
        %1138 = vmatmul.mubr.f32.gmra.mxu0 %v882
        %v1139 = vpop.f32.mrf.mxu0
        %v1140 = vadd.f32 0.0, %v1139
        %v1141 = vpop.f32.mrf.mxu0
        %1142 = vmatprep.mubr.f32.mxu0 0.0
        %1143 = vmatmul.mubr.f32.gmra.mxu0 %v885
        %v1144 = vpop.f32.mrf.mxu0
        %v1145 = vadd.f32 0.0, %v1144
        %v1146 = vpop.f32.mrf.mxu0
        %1147 = vmatprep.mubr.f32.mxu0 0.0
        %1148 = vmatmul.mubr.f32.gmra.mxu0 %v888
        %v1149 = vpop.f32.mrf.mxu0
        %v1150 = vadd.f32 0.0, %v1149
        %v1151 = vpop.f32.mrf.mxu0
        %1152 = vmatprep.mubr.f32.mxu0 0.0
        %1153 = vmatmul.mubr.f32.gmra.mxu0 %v891
        %v1154 = vpop.f32.mrf.mxu0
        %v1155 = vadd.f32 0.0, %v1154
        %v1156 = vpop.f32.mrf.mxu0
        %1157 = vdwg.mxu0
        %v1158 = vadd.f32 %v324, %v960
        %v1159 = vadd.f32 %v325, %v965
        %v1160 = vadd.f32 %v326, %v970
        %v1161 = vadd.f32 %v327, %v975
        %v1162 = vadd.f32 %v328, %v980
        %v1163 = vadd.f32 %v329, %v985
        %v1164 = vadd.f32 %v330, %v990
        %v1165 = vadd.f32 %v331, %v995
        %v1166 = vadd.f32 %v332, %v1000
        %v1167 = vadd.f32 %v333, %v1005
        %v1168 = vadd.f32 %v334, %v1010
        %v1169 = vadd.f32 %v335, %v1015
        %v1170 = vadd.f32 %v336, %v1020
        %v1171 = vadd.f32 %v337, %v1025
        %v1172 = vadd.f32 %v338, %v1030
        %v1173 = vadd.f32 %v339, %v1035
        %v1174 = vadd.f32 %v340, %v1040
        %v1175 = vadd.f32 %v341, %v1045
        %v1176 = vadd.f32 %v342, %v1050
        %v1177 = vadd.f32 %v343, %v1055
        %v1178 = vadd.f32 %v344, %v1060
        %v1179 = vadd.f32 %v345, %v1065
        %v1180 = vadd.f32 %v346, %v1070
        %v1181 = vadd.f32 %v347, %v1075
        %v1182 = vadd.f32 %v348, %v1080
        %v1183 = vadd.f32 %v349, %v1085
        %v1184 = vadd.f32 %v350, %v1090
        %v1185 = vadd.f32 %v351, %v1095
        %v1186 = vadd.f32 %v352, %v1100
        %v1187 = vadd.f32 %v353, %v1105
        %v1188 = vadd.f32 %v354, %v1110
        %v1189 = vadd.f32 %v355, %v1115
        %v1190 = vadd.f32 %v356, %v1120
        %v1191 = vadd.f32 %v357, %v1125
        %v1192 = vadd.f32 %v358, %v1130
        %v1193 = vadd.f32 %v359, %v1135
        %v1194 = vadd.f32 %v360, %v1140
        %v1195 = vadd.f32 %v361, %v1145
        %v1196 = vadd.f32 %v362, %v1150
        %v1197 = vadd.f32 %v363, %v1155
        %v1198 = vld [vmem:[%s5] sm:$0x1]
        %v1200 = vlaneseq
        %v1201 = vshrl.u32 %v1200, 7
        %v1202 = vsub.s32 0, %v1201
        %v1203 = vrot.slane %v1198, %v1202
        %v1205 = vadd.f32 %v1158, %v1203
        %v1206 = vadd.f32 %v1159, %v1203
        %v1207 = vadd.f32 %v1160, %v1203
        %v1208 = vadd.f32 %v1161, %v1203
        %v1209 = vadd.f32 %v1162, %v1203
        %v1210 = vadd.f32 %v1163, %v1203
        %v1211 = vadd.f32 %v1164, %v1203
        %v1212 = vadd.f32 %v1165, %v1203
        %v1213 = vadd.f32 %v1166, %v1203
        %v1214 = vadd.f32 %v1167, %v1203
        %v1215 = vadd.f32 %v1168, %v1203
        %v1216 = vadd.f32 %v1169, %v1203
        %v1217 = vadd.f32 %v1170, %v1203
        %v1218 = vadd.f32 %v1171, %v1203
        %v1219 = vadd.f32 %v1172, %v1203
        %v1220 = vadd.f32 %v1173, %v1203
        %v1221 = vadd.f32 %v1174, %v1203
        %v1222 = vadd.f32 %v1175, %v1203
        %v1223 = vadd.f32 %v1176, %v1203
        %v1224 = vadd.f32 %v1177, %v1203
        %v1225 = vadd.f32 %v1178, %v1203
        %v1226 = vadd.f32 %v1179, %v1203
        %v1227 = vadd.f32 %v1180, %v1203
        %v1228 = vadd.f32 %v1181, %v1203
        %v1229 = vadd.f32 %v1182, %v1203
        %v1230 = vadd.f32 %v1183, %v1203
        %v1231 = vadd.f32 %v1184, %v1203
        %v1232 = vadd.f32 %v1185, %v1203
        %v1233 = vadd.f32 %v1186, %v1203
        %v1234 = vadd.f32 %v1187, %v1203
        %v1235 = vadd.f32 %v1188, %v1203
        %v1236 = vadd.f32 %v1189, %v1203
        %v1237 = vadd.f32 %v1190, %v1203
        %v1238 = vadd.f32 %v1191, %v1203
        %v1239 = vadd.f32 %v1192, %v1203
        %v1240 = vadd.f32 %v1193, %v1203
        %v1241 = vadd.f32 %v1194, %v1203
        %v1242 = vadd.f32 %v1195, %v1203
        %v1243 = vadd.f32 %v1196, %v1203
        %v1244 = vadd.f32 %v1197, %v1203
        %1245 = vadd.xlane.f32.xlu0 %v1205
        %v1246 = vpop.xlane.xlu0 %1245
        %1247 = vadd.xlane.f32.xlu0 %v1206
        %v1248 = vpop.xlane.xlu0 %1247
        %1249 = vadd.xlane.f32.xlu0 %v1207
        %v1250 = vpop.xlane.xlu0 %1249
        %1251 = vadd.xlane.f32.xlu0 %v1208
        %v1252 = vpop.xlane.xlu0 %1251
        %1253 = vadd.xlane.f32.xlu0 %v1209
        %v1254 = vpop.xlane.xlu0 %1253
        %1255 = vadd.xlane.f32.xlu0 %v1210
        %v1256 = vpop.xlane.xlu0 %1255
        %1257 = vadd.xlane.f32.xlu0 %v1211
        %v1258 = vpop.xlane.xlu0 %1257
        %1259 = vadd.xlane.f32.xlu0 %v1212
        %v1260 = vpop.xlane.xlu0 %1259
        %1261 = vadd.xlane.f32.xlu0 %v1213
        %v1262 = vpop.xlane.xlu0 %1261
        %1263 = vadd.xlane.f32.xlu0 %v1214
        %v1264 = vpop.xlane.xlu0 %1263
        %1265 = vadd.xlane.f32.xlu0 %v1215
        %v1266 = vpop.xlane.xlu0 %1265
        %1267 = vadd.xlane.f32.xlu0 %v1216
        %v1268 = vpop.xlane.xlu0 %1267
        %1269 = vadd.xlane.f32.xlu0 %v1217
        %v1270 = vpop.xlane.xlu0 %1269
        %1271 = vadd.xlane.f32.xlu0 %v1218
        %v1272 = vpop.xlane.xlu0 %1271
        %1273 = vadd.xlane.f32.xlu0 %v1219
        %v1274 = vpop.xlane.xlu0 %1273
        %1275 = vadd.xlane.f32.xlu0 %v1220
        %v1276 = vpop.xlane.xlu0 %1275
        %1277 = vadd.xlane.f32.xlu0 %v1221
        %v1278 = vpop.xlane.xlu0 %1277
        %1279 = vadd.xlane.f32.xlu0 %v1222
        %v1280 = vpop.xlane.xlu0 %1279
        %1281 = vadd.xlane.f32.xlu0 %v1223
        %v1282 = vpop.xlane.xlu0 %1281
        %1283 = vadd.xlane.f32.xlu0 %v1224
        %v1284 = vpop.xlane.xlu0 %1283
        %1285 = vadd.xlane.f32.xlu0 %v1225
        %v1286 = vpop.xlane.xlu0 %1285
        %1287 = vadd.xlane.f32.xlu0 %v1226
        %v1288 = vpop.xlane.xlu0 %1287
        %1289 = vadd.xlane.f32.xlu0 %v1227
        %v1290 = vpop.xlane.xlu0 %1289
        %1291 = vadd.xlane.f32.xlu0 %v1228
        %v1292 = vpop.xlane.xlu0 %1291
        %1293 = vadd.xlane.f32.xlu0 %v1229
        %v1294 = vpop.xlane.xlu0 %1293
        %1295 = vadd.xlane.f32.xlu0 %v1230
        %v1296 = vpop.xlane.xlu0 %1295
        %1297 = vadd.xlane.f32.xlu0 %v1231
        %v1298 = vpop.xlane.xlu0 %1297
        %1299 = vadd.xlane.f32.xlu0 %v1232
        %v1300 = vpop.xlane.xlu0 %1299
        %1301 = vadd.xlane.f32.xlu0 %v1233
        %v1302 = vpop.xlane.xlu0 %1301
        %1303 = vadd.xlane.f32.xlu0 %v1234
        %v1304 = vpop.xlane.xlu0 %1303
        %1305 = vadd.xlane.f32.xlu0 %v1235
        %v1306 = vpop.xlane.xlu0 %1305
        %1307 = vadd.xlane.f32.xlu0 %v1236
        %v1308 = vpop.xlane.xlu0 %1307
        %1309 = vadd.xlane.f32.xlu0 %v1237
        %v1310 = vpop.xlane.xlu0 %1309
        %1311 = vadd.xlane.f32.xlu0 %v1238
        %v1312 = vpop.xlane.xlu0 %1311
        %1313 = vadd.xlane.f32.xlu0 %v1239
        %v1314 = vpop.xlane.xlu0 %1313
        %1315 = vadd.xlane.f32.xlu0 %v1240
        %v1316 = vpop.xlane.xlu0 %1315
        %1317 = vadd.xlane.f32.xlu0 %v1241
        %v1318 = vpop.xlane.xlu0 %1317
        %1319 = vadd.xlane.f32.xlu0 %v1242
        %v1320 = vpop.xlane.xlu0 %1319
        %1321 = vadd.xlane.f32.xlu0 %v1243
        %v1322 = vpop.xlane.xlu0 %1321
        %1323 = vadd.xlane.f32.xlu0 %v1244
        %v1324 = vpop.xlane.xlu0 %1323
        %v1325 = vmul.f32 %v1246, 0.0078125
        %v1326 = vmul.f32 %v1248, 0.0078125
        %v1327 = vmul.f32 %v1250, 0.0078125
        %v1328 = vmul.f32 %v1252, 0.0078125
        %v1329 = vmul.f32 %v1254, 0.0078125
        %v1330 = vmul.f32 %v1256, 0.0078125
        %v1331 = vmul.f32 %v1258, 0.0078125
        %v1332 = vmul.f32 %v1260, 0.0078125
        %v1333 = vmul.f32 %v1262, 0.0078125
        %v1334 = vmul.f32 %v1264, 0.0078125
        %v1335 = vmul.f32 %v1266, 0.0078125
        %v1336 = vmul.f32 %v1268, 0.0078125
        %v1337 = vmul.f32 %v1270, 0.0078125
        %v1338 = vmul.f32 %v1272, 0.0078125
        %v1339 = vmul.f32 %v1274, 0.0078125
        %v1340 = vmul.f32 %v1276, 0.0078125
        %v1341 = vmul.f32 %v1278, 0.0078125
        %v1342 = vmul.f32 %v1280, 0.0078125
        %v1343 = vmul.f32 %v1282, 0.0078125
        %v1344 = vmul.f32 %v1284, 0.0078125
        %v1345 = vmul.f32 %v1286, 0.0078125
        %v1346 = vmul.f32 %v1288, 0.0078125
        %v1347 = vmul.f32 %v1290, 0.0078125
        %v1348 = vmul.f32 %v1292, 0.0078125
        %v1349 = vmul.f32 %v1294, 0.0078125
        %v1350 = vmul.f32 %v1296, 0.0078125
        %v1351 = vmul.f32 %v1298, 0.0078125
        %v1352 = vmul.f32 %v1300, 0.0078125
        %v1353 = vmul.f32 %v1302, 0.0078125
        %v1354 = vmul.f32 %v1304, 0.0078125
        %v1355 = vmul.f32 %v1306, 0.0078125
        %v1356 = vmul.f32 %v1308, 0.0078125
        %v1357 = vmul.f32 %v1310, 0.0078125
        %v1358 = vmul.f32 %v1312, 0.0078125
        %v1359 = vmul.f32 %v1314, 0.0078125
        %v1360 = vmul.f32 %v1316, 0.0078125
        %v1361 = vmul.f32 %v1318, 0.0078125
        %v1362 = vmul.f32 %v1320, 0.0078125
        %v1363 = vmul.f32 %v1322, 0.0078125
        %v1364 = vmul.f32 %v1324, 0.0078125
        %v1365 = vmul.f32 %v1205, %v1205
        %v1366 = vmul.f32 %v1206, %v1206
        %v1367 = vmul.f32 %v1207, %v1207
        %v1368 = vmul.f32 %v1208, %v1208
        %v1369 = vmul.f32 %v1209, %v1209
        %v1370 = vmul.f32 %v1210, %v1210
        %v1371 = vmul.f32 %v1211, %v1211
        %v1372 = vmul.f32 %v1212, %v1212
        %v1373 = vmul.f32 %v1213, %v1213
        %v1374 = vmul.f32 %v1214, %v1214
        %v1375 = vmul.f32 %v1215, %v1215
        %v1376 = vmul.f32 %v1216, %v1216
        %v1377 = vmul.f32 %v1217, %v1217
        %v1378 = vmul.f32 %v1218, %v1218
        %v1379 = vmul.f32 %v1219, %v1219
        %v1380 = vmul.f32 %v1220, %v1220
        %v1381 = vmul.f32 %v1221, %v1221
        %v1382 = vmul.f32 %v1222, %v1222
        %v1383 = vmul.f32 %v1223, %v1223
        %v1384 = vmul.f32 %v1224, %v1224
        %v1385 = vmul.f32 %v1225, %v1225
        %v1386 = vmul.f32 %v1226, %v1226
        %v1387 = vmul.f32 %v1227, %v1227
        %v1388 = vmul.f32 %v1228, %v1228
        %v1389 = vmul.f32 %v1229, %v1229
        %v1390 = vmul.f32 %v1230, %v1230
        %v1391 = vmul.f32 %v1231, %v1231
        %v1392 = vmul.f32 %v1232, %v1232
        %v1393 = vmul.f32 %v1233, %v1233
        %v1394 = vmul.f32 %v1234, %v1234
        %v1395 = vmul.f32 %v1235, %v1235
        %v1396 = vmul.f32 %v1236, %v1236
        %v1397 = vmul.f32 %v1237, %v1237
        %v1398 = vmul.f32 %v1238, %v1238
        %v1399 = vmul.f32 %v1239, %v1239
        %v1400 = vmul.f32 %v1240, %v1240
        %v1401 = vmul.f32 %v1241, %v1241
        %v1402 = vmul.f32 %v1242, %v1242
        %v1403 = vmul.f32 %v1243, %v1243
        %v1404 = vmul.f32 %v1244, %v1244
        %1405 = vadd.xlane.f32.xlu0 %v1365
        %v1406 = vpop.xlane.xlu0 %1405
        %1407 = vadd.xlane.f32.xlu0 %v1366
        %v1408 = vpop.xlane.xlu0 %1407
        %1409 = vadd.xlane.f32.xlu0 %v1367
        %v1410 = vpop.xlane.xlu0 %1409
        %1411 = vadd.xlane.f32.xlu0 %v1368
        %v1412 = vpop.xlane.xlu0 %1411
        %1413 = vadd.xlane.f32.xlu0 %v1369
        %v1414 = vpop.xlane.xlu0 %1413
        %1415 = vadd.xlane.f32.xlu0 %v1370
        %v1416 = vpop.xlane.xlu0 %1415
        %1417 = vadd.xlane.f32.xlu0 %v1371
        %v1418 = vpop.xlane.xlu0 %1417
        %1419 = vadd.xlane.f32.xlu0 %v1372
        %v1420 = vpop.xlane.xlu0 %1419
        %1421 = vadd.xlane.f32.xlu0 %v1373
        %v1422 = vpop.xlane.xlu0 %1421
        %1423 = vadd.xlane.f32.xlu0 %v1374
        %v1424 = vpop.xlane.xlu0 %1423
        %1425 = vadd.xlane.f32.xlu0 %v1375
        %v1426 = vpop.xlane.xlu0 %1425
        %1427 = vadd.xlane.f32.xlu0 %v1376
        %v1428 = vpop.xlane.xlu0 %1427
        %1429 = vadd.xlane.f32.xlu0 %v1377
        %v1430 = vpop.xlane.xlu0 %1429
        %1431 = vadd.xlane.f32.xlu0 %v1378
        %v1432 = vpop.xlane.xlu0 %1431
        %1433 = vadd.xlane.f32.xlu0 %v1379
        %v1434 = vpop.xlane.xlu0 %1433
        %1435 = vadd.xlane.f32.xlu0 %v1380
        %v1436 = vpop.xlane.xlu0 %1435
        %1437 = vadd.xlane.f32.xlu0 %v1381
        %v1438 = vpop.xlane.xlu0 %1437
        %1439 = vadd.xlane.f32.xlu0 %v1382
        %v1440 = vpop.xlane.xlu0 %1439
        %1441 = vadd.xlane.f32.xlu0 %v1383
        %v1442 = vpop.xlane.xlu0 %1441
        %1443 = vadd.xlane.f32.xlu0 %v1384
        %v1444 = vpop.xlane.xlu0 %1443
        %1445 = vadd.xlane.f32.xlu0 %v1385
        %v1446 = vpop.xlane.xlu0 %1445
        %1447 = vadd.xlane.f32.xlu0 %v1386
        %v1448 = vpop.xlane.xlu0 %1447
        %1449 = vadd.xlane.f32.xlu0 %v1387
        %v1450 = vpop.xlane.xlu0 %1449
        %1451 = vadd.xlane.f32.xlu0 %v1388
        %v1452 = vpop.xlane.xlu0 %1451
        %1453 = vadd.xlane.f32.xlu0 %v1389
        %v1454 = vpop.xlane.xlu0 %1453
        %1455 = vadd.xlane.f32.xlu0 %v1390
        %v1456 = vpop.xlane.xlu0 %1455
        %1457 = vadd.xlane.f32.xlu0 %v1391
        %v1458 = vpop.xlane.xlu0 %1457
        %1459 = vadd.xlane.f32.xlu0 %v1392
        %v1460 = vpop.xlane.xlu0 %1459
        %1461 = vadd.xlane.f32.xlu0 %v1393
        %v1462 = vpop.xlane.xlu0 %1461
        %1463 = vadd.xlane.f32.xlu0 %v1394
        %v1464 = vpop.xlane.xlu0 %1463
        %1465 = vadd.xlane.f32.xlu0 %v1395
        %v1466 = vpop.xlane.xlu0 %1465
        %1467 = vadd.xlane.f32.xlu0 %v1396
        %v1468 = vpop.xlane.xlu0 %1467
        %1469 = vadd.xlane.f32.xlu0 %v1397
        %v1470 = vpop.xlane.xlu0 %1469
        %1471 = vadd.xlane.f32.xlu0 %v1398
        %v1472 = vpop.xlane.xlu0 %1471
        %1473 = vadd.xlane.f32.xlu0 %v1399
        %v1474 = vpop.xlane.xlu0 %1473
        %1475 = vadd.xlane.f32.xlu0 %v1400
        %v1476 = vpop.xlane.xlu0 %1475
        %1477 = vadd.xlane.f32.xlu0 %v1401
        %v1478 = vpop.xlane.xlu0 %1477
        %1479 = vadd.xlane.f32.xlu0 %v1402
        %v1480 = vpop.xlane.xlu0 %1479
        %1481 = vadd.xlane.f32.xlu0 %v1403
        %v1482 = vpop.xlane.xlu0 %1481
        %1483 = vadd.xlane.f32.xlu0 %v1404
        %v1484 = vpop.xlane.xlu0 %1483
        %v1485 = vmul.f32 %v1406, 0.0078125
        %v1486 = vmul.f32 %v1408, 0.0078125
        %v1487 = vmul.f32 %v1410, 0.0078125
        %v1488 = vmul.f32 %v1412, 0.0078125
        %v1489 = vmul.f32 %v1414, 0.0078125
        %v1490 = vmul.f32 %v1416, 0.0078125
        %v1491 = vmul.f32 %v1418, 0.0078125
        %v1492 = vmul.f32 %v1420, 0.0078125
        %v1493 = vmul.f32 %v1422, 0.0078125
        %v1494 = vmul.f32 %v1424, 0.0078125
        %v1495 = vmul.f32 %v1426, 0.0078125
        %v1496 = vmul.f32 %v1428, 0.0078125
        %v1497 = vmul.f32 %v1430, 0.0078125
        %v1498 = vmul.f32 %v1432, 0.0078125
        %v1499 = vmul.f32 %v1434, 0.0078125
        %v1500 = vmul.f32 %v1436, 0.0078125
        %v1501 = vmul.f32 %v1438, 0.0078125
        %v1502 = vmul.f32 %v1440, 0.0078125
        %v1503 = vmul.f32 %v1442, 0.0078125
        %v1504 = vmul.f32 %v1444, 0.0078125
        %v1505 = vmul.f32 %v1446, 0.0078125
        %v1506 = vmul.f32 %v1448, 0.0078125
        %v1507 = vmul.f32 %v1450, 0.0078125
        %v1508 = vmul.f32 %v1452, 0.0078125
        %v1509 = vmul.f32 %v1454, 0.0078125
        %v1510 = vmul.f32 %v1456, 0.0078125
        %v1511 = vmul.f32 %v1458, 0.0078125
        %v1512 = vmul.f32 %v1460, 0.0078125
        %v1513 = vmul.f32 %v1462, 0.0078125
        %v1514 = vmul.f32 %v1464, 0.0078125
        %v1515 = vmul.f32 %v1466, 0.0078125
        %v1516 = vmul.f32 %v1468, 0.0078125
        %v1517 = vmul.f32 %v1470, 0.0078125
        %v1518 = vmul.f32 %v1472, 0.0078125
        %v1519 = vmul.f32 %v1474, 0.0078125
        %v1520 = vmul.f32 %v1476, 0.0078125
        %v1521 = vmul.f32 %v1478, 0.0078125
        %v1522 = vmul.f32 %v1480, 0.0078125
        %v1523 = vmul.f32 %v1482, 0.0078125
        %v1524 = vmul.f32 %v1484, 0.0078125
        %v1525 = vmul.f32 %v1325, %v1325
        %v1526 = vmul.f32 %v1326, %v1326
        %v1527 = vmul.f32 %v1327, %v1327
        %v1528 = vmul.f32 %v1328, %v1328
        %v1529 = vmul.f32 %v1329, %v1329
        %v1530 = vmul.f32 %v1330, %v1330
        %v1531 = vmul.f32 %v1331, %v1331
        %v1532 = vmul.f32 %v1332, %v1332
        %v1533 = vmul.f32 %v1333, %v1333
        %v1534 = vmul.f32 %v1334, %v1334
        %v1535 = vmul.f32 %v1335, %v1335
        %v1536 = vmul.f32 %v1336, %v1336
        %v1537 = vmul.f32 %v1337, %v1337
        %v1538 = vmul.f32 %v1338, %v1338
        %v1539 = vmul.f32 %v1339, %v1339
        %v1540 = vmul.f32 %v1340, %v1340
        %v1541 = vmul.f32 %v1341, %v1341
        %v1542 = vmul.f32 %v1342, %v1342
        %v1543 = vmul.f32 %v1343, %v1343
        %v1544 = vmul.f32 %v1344, %v1344
        %v1545 = vmul.f32 %v1345, %v1345
        %v1546 = vmul.f32 %v1346, %v1346
        %v1547 = vmul.f32 %v1347, %v1347
        %v1548 = vmul.f32 %v1348, %v1348
        %v1549 = vmul.f32 %v1349, %v1349
        %v1550 = vmul.f32 %v1350, %v1350
        %v1551 = vmul.f32 %v1351, %v1351
        %v1552 = vmul.f32 %v1352, %v1352
        %v1553 = vmul.f32 %v1353, %v1353
        %v1554 = vmul.f32 %v1354, %v1354
        %v1555 = vmul.f32 %v1355, %v1355
        %v1556 = vmul.f32 %v1356, %v1356
        %v1557 = vmul.f32 %v1357, %v1357
        %v1558 = vmul.f32 %v1358, %v1358
        %v1559 = vmul.f32 %v1359, %v1359
        %v1560 = vmul.f32 %v1360, %v1360
        %v1561 = vmul.f32 %v1361, %v1361
        %v1562 = vmul.f32 %v1362, %v1362
        %v1563 = vmul.f32 %v1363, %v1363
        %v1564 = vmul.f32 %v1364, %v1364
        %v1565 = vsub.f32 %v1485, %v1525
        %v1566 = vsub.f32 %v1486, %v1526
        %v1567 = vsub.f32 %v1487, %v1527
        %v1568 = vsub.f32 %v1488, %v1528
        %v1569 = vsub.f32 %v1489, %v1529
        %v1570 = vsub.f32 %v1490, %v1530
        %v1571 = vsub.f32 %v1491, %v1531
        %v1572 = vsub.f32 %v1492, %v1532
        %v1573 = vsub.f32 %v1493, %v1533
        %v1574 = vsub.f32 %v1494, %v1534
        %v1575 = vsub.f32 %v1495, %v1535
        %v1576 = vsub.f32 %v1496, %v1536
        %v1577 = vsub.f32 %v1497, %v1537
        %v1578 = vsub.f32 %v1498, %v1538
        %v1579 = vsub.f32 %v1499, %v1539
        %v1580 = vsub.f32 %v1500, %v1540
        %v1581 = vsub.f32 %v1501, %v1541
        %v1582 = vsub.f32 %v1502, %v1542
        %v1583 = vsub.f32 %v1503, %v1543
        %v1584 = vsub.f32 %v1504, %v1544
        %v1585 = vsub.f32 %v1505, %v1545
        %v1586 = vsub.f32 %v1506, %v1546
        %v1587 = vsub.f32 %v1507, %v1547
        %v1588 = vsub.f32 %v1508, %v1548
        %v1589 = vsub.f32 %v1509, %v1549
        %v1590 = vsub.f32 %v1510, %v1550
        %v1591 = vsub.f32 %v1511, %v1551
        %v1592 = vsub.f32 %v1512, %v1552
        %v1593 = vsub.f32 %v1513, %v1553
        %v1594 = vsub.f32 %v1514, %v1554
        %v1595 = vsub.f32 %v1515, %v1555
        %v1596 = vsub.f32 %v1516, %v1556
        %v1597 = vsub.f32 %v1517, %v1557
        %v1598 = vsub.f32 %v1518, %v1558
        %v1599 = vsub.f32 %v1519, %v1559
        %v1600 = vsub.f32 %v1520, %v1560
        %v1601 = vsub.f32 %v1521, %v1561
        %v1602 = vsub.f32 %v1522, %v1562
        %v1603 = vsub.f32 %v1523, %v1563
        %v1604 = vsub.f32 %v1524, %v1564
        %v1605 = vmax.f32 %v1565, 0.0
        %v1606 = vmax.f32 %v1566, 0.0
        %v1607 = vmax.f32 %v1567, 0.0
        %v1608 = vmax.f32 %v1568, 0.0
        %v1609 = vmax.f32 %v1569, 0.0
        %v1610 = vmax.f32 %v1570, 0.0
        %v1611 = vmax.f32 %v1571, 0.0
        %v1612 = vmax.f32 %v1572, 0.0
        %v1613 = vmax.f32 %v1573, 0.0
        %v1614 = vmax.f32 %v1574, 0.0
        %v1615 = vmax.f32 %v1575, 0.0
        %v1616 = vmax.f32 %v1576, 0.0
        %v1617 = vmax.f32 %v1577, 0.0
        %v1618 = vmax.f32 %v1578, 0.0
        %v1619 = vmax.f32 %v1579, 0.0
        %v1620 = vmax.f32 %v1580, 0.0
        %v1621 = vmax.f32 %v1581, 0.0
        %v1622 = vmax.f32 %v1582, 0.0
        %v1623 = vmax.f32 %v1583, 0.0
        %v1624 = vmax.f32 %v1584, 0.0
        %v1625 = vmax.f32 %v1585, 0.0
        %v1626 = vmax.f32 %v1586, 0.0
        %v1627 = vmax.f32 %v1587, 0.0
        %v1628 = vmax.f32 %v1588, 0.0
        %v1629 = vmax.f32 %v1589, 0.0
        %v1630 = vmax.f32 %v1590, 0.0
        %v1631 = vmax.f32 %v1591, 0.0
        %v1632 = vmax.f32 %v1592, 0.0
        %v1633 = vmax.f32 %v1593, 0.0
        %v1634 = vmax.f32 %v1594, 0.0
        %v1635 = vmax.f32 %v1595, 0.0
        %v1636 = vmax.f32 %v1596, 0.0
        %v1637 = vmax.f32 %v1597, 0.0
        %v1638 = vmax.f32 %v1598, 0.0
        %v1639 = vmax.f32 %v1599, 0.0
        %v1640 = vmax.f32 %v1600, 0.0
        %v1641 = vmax.f32 %v1601, 0.0
        %v1642 = vmax.f32 %v1602, 0.0
        %v1643 = vmax.f32 %v1603, 0.0
        %v1644 = vmax.f32 %v1604, 0.0
        %v1645 = vsub.f32 %v1205, %v1325
        %v1646 = vsub.f32 %v1206, %v1326
        %v1647 = vsub.f32 %v1207, %v1327
        %v1648 = vsub.f32 %v1208, %v1328
        %v1649 = vsub.f32 %v1209, %v1329
        %v1650 = vsub.f32 %v1210, %v1330
        %v1651 = vsub.f32 %v1211, %v1331
        %v1652 = vsub.f32 %v1212, %v1332
        %v1653 = vsub.f32 %v1213, %v1333
        %v1654 = vsub.f32 %v1214, %v1334
        %v1655 = vsub.f32 %v1215, %v1335
        %v1656 = vsub.f32 %v1216, %v1336
        %v1657 = vsub.f32 %v1217, %v1337
        %v1658 = vsub.f32 %v1218, %v1338
        %v1659 = vsub.f32 %v1219, %v1339
        %v1660 = vsub.f32 %v1220, %v1340
        %v1661 = vsub.f32 %v1221, %v1341
        %v1662 = vsub.f32 %v1222, %v1342
        %v1663 = vsub.f32 %v1223, %v1343
        %v1664 = vsub.f32 %v1224, %v1344
        %v1665 = vsub.f32 %v1225, %v1345
        %v1666 = vsub.f32 %v1226, %v1346
        %v1667 = vsub.f32 %v1227, %v1347
        %v1668 = vsub.f32 %v1228, %v1348
        %v1669 = vsub.f32 %v1229, %v1349
        %v1670 = vsub.f32 %v1230, %v1350
        %v1671 = vsub.f32 %v1231, %v1351
        %v1672 = vsub.f32 %v1232, %v1352
        %v1673 = vsub.f32 %v1233, %v1353
        %v1674 = vsub.f32 %v1234, %v1354
        %v1675 = vsub.f32 %v1235, %v1355
        %v1676 = vsub.f32 %v1236, %v1356
        %v1677 = vsub.f32 %v1237, %v1357
        %v1678 = vsub.f32 %v1238, %v1358
        %v1679 = vsub.f32 %v1239, %v1359
        %v1680 = vsub.f32 %v1240, %v1360
        %v1681 = vsub.f32 %v1241, %v1361
        %v1682 = vsub.f32 %v1242, %v1362
        %v1683 = vsub.f32 %v1243, %v1363
        %v1684 = vsub.f32 %v1244, %v1364
        %v1685 = vadd.f32 %v1605, 1e-05
        %v1686 = vadd.f32 %v1606, 1e-05
        %v1687 = vadd.f32 %v1607, 1e-05
        %v1688 = vadd.f32 %v1608, 1e-05
        %v1689 = vadd.f32 %v1609, 1e-05
        %v1690 = vadd.f32 %v1610, 1e-05
        %v1691 = vadd.f32 %v1611, 1e-05
        %v1692 = vadd.f32 %v1612, 1e-05
        %v1693 = vadd.f32 %v1613, 1e-05
        %v1694 = vadd.f32 %v1614, 1e-05
        %v1695 = vadd.f32 %v1615, 1e-05
        %v1696 = vadd.f32 %v1616, 1e-05
        %v1697 = vadd.f32 %v1617, 1e-05
        %v1698 = vadd.f32 %v1618, 1e-05
        %v1699 = vadd.f32 %v1619, 1e-05
        %v1700 = vadd.f32 %v1620, 1e-05
        %v1701 = vadd.f32 %v1621, 1e-05
        %v1702 = vadd.f32 %v1622, 1e-05
        %v1703 = vadd.f32 %v1623, 1e-05
        %v1704 = vadd.f32 %v1624, 1e-05
        %v1705 = vadd.f32 %v1625, 1e-05
        %v1706 = vadd.f32 %v1626, 1e-05
        %v1707 = vadd.f32 %v1627, 1e-05
        %v1708 = vadd.f32 %v1628, 1e-05
        %v1709 = vadd.f32 %v1629, 1e-05
        %v1710 = vadd.f32 %v1630, 1e-05
        %v1711 = vadd.f32 %v1631, 1e-05
        %v1712 = vadd.f32 %v1632, 1e-05
        %v1713 = vadd.f32 %v1633, 1e-05
        %v1714 = vadd.f32 %v1634, 1e-05
        %v1715 = vadd.f32 %v1635, 1e-05
        %v1716 = vadd.f32 %v1636, 1e-05
        %v1717 = vadd.f32 %v1637, 1e-05
        %v1718 = vadd.f32 %v1638, 1e-05
        %v1719 = vadd.f32 %v1639, 1e-05
        %v1720 = vadd.f32 %v1640, 1e-05
        %v1721 = vadd.f32 %v1641, 1e-05
        %v1722 = vadd.f32 %v1642, 1e-05
        %v1723 = vadd.f32 %v1643, 1e-05
        %v1724 = vadd.f32 %v1644, 1e-05
        %v1725 = vrsqrt.pop %v1685
        %v1726 = vrsqrt.pop %v1686
        %v1727 = vrsqrt.pop %v1687
        %v1728 = vrsqrt.pop %v1688
        %v1729 = vrsqrt.pop %v1689
        %v1730 = vrsqrt.pop %v1690
        %v1731 = vrsqrt.pop %v1691
        %v1732 = vrsqrt.pop %v1692
        %v1733 = vrsqrt.pop %v1693
        %v1734 = vrsqrt.pop %v1694
        %v1735 = vrsqrt.pop %v1695
        %v1736 = vrsqrt.pop %v1696
        %v1737 = vrsqrt.pop %v1697
        %v1738 = vrsqrt.pop %v1698
        %v1739 = vrsqrt.pop %v1699
        %v1740 = vrsqrt.pop %v1700
        %v1741 = vrsqrt.pop %v1701
        %v1742 = vrsqrt.pop %v1702
        %v1743 = vrsqrt.pop %v1703
        %v1744 = vrsqrt.pop %v1704
        %v1745 = vrsqrt.pop %v1705
        %v1746 = vrsqrt.pop %v1706
        %v1747 = vrsqrt.pop %v1707
        %v1748 = vrsqrt.pop %v1708
        %v1749 = vrsqrt.pop %v1709
        %v1750 = vrsqrt.pop %v1710
        %v1751 = vrsqrt.pop %v1711
        %v1752 = vrsqrt.pop %v1712
        %v1753 = vrsqrt.pop %v1713
        %v1754 = vrsqrt.pop %v1714
        %v1755 = vrsqrt.pop %v1715
        %v1756 = vrsqrt.pop %v1716
        %v1757 = vrsqrt.pop %v1717
        %v1758 = vrsqrt.pop %v1718
        %v1759 = vrsqrt.pop %v1719
        %v1760 = vrsqrt.pop %v1720
        %v1761 = vrsqrt.pop %v1721
        %v1762 = vrsqrt.pop %v1722
        %v1763 = vrsqrt.pop %v1723
        %v1764 = vrsqrt.pop %v1724
        %v1765 = vmul.f32 %v1645, %v1725
        %v1766 = vmul.f32 %v1646, %v1726
        %v1767 = vmul.f32 %v1647, %v1727
        %v1768 = vmul.f32 %v1648, %v1728
        %v1769 = vmul.f32 %v1649, %v1729
        %v1770 = vmul.f32 %v1650, %v1730
        %v1771 = vmul.f32 %v1651, %v1731
        %v1772 = vmul.f32 %v1652, %v1732
        %v1773 = vmul.f32 %v1653, %v1733
        %v1774 = vmul.f32 %v1654, %v1734
        %v1775 = vmul.f32 %v1655, %v1735
        %v1776 = vmul.f32 %v1656, %v1736
        %v1777 = vmul.f32 %v1657, %v1737
        %v1778 = vmul.f32 %v1658, %v1738
        %v1779 = vmul.f32 %v1659, %v1739
        %v1780 = vmul.f32 %v1660, %v1740
        %v1781 = vmul.f32 %v1661, %v1741
        %v1782 = vmul.f32 %v1662, %v1742
        %v1783 = vmul.f32 %v1663, %v1743
        %v1784 = vmul.f32 %v1664, %v1744
        %v1785 = vmul.f32 %v1665, %v1745
        %v1786 = vmul.f32 %v1666, %v1746
        %v1787 = vmul.f32 %v1667, %v1747
        %v1788 = vmul.f32 %v1668, %v1748
        %v1789 = vmul.f32 %v1669, %v1749
        %v1790 = vmul.f32 %v1670, %v1750
        %v1791 = vmul.f32 %v1671, %v1751
        %v1792 = vmul.f32 %v1672, %v1752
        %v1793 = vmul.f32 %v1673, %v1753
        %v1794 = vmul.f32 %v1674, %v1754
        %v1795 = vmul.f32 %v1675, %v1755
        %v1796 = vmul.f32 %v1676, %v1756
        %v1797 = vmul.f32 %v1677, %v1757
        %v1798 = vmul.f32 %v1678, %v1758
        %v1799 = vmul.f32 %v1679, %v1759
        %v1800 = vmul.f32 %v1680, %v1760
        %v1801 = vmul.f32 %v1681, %v1761
        %v1802 = vmul.f32 %v1682, %v1762
        %v1803 = vmul.f32 %v1683, %v1763
        %v1804 = vmul.f32 %v1684, %v1764
        %v1805 = vld [vmem:[%s6] sm:$0x1]
        %v1807 = vlaneseq
        %v1808 = vshrl.u32 %v1807, 7
        %v1809 = vsub.s32 0, %v1808
        %v1810 = vrot.slane %v1805, %v1809
        %v1812 = vmul.f32 %v1765, %v1810
        %v1813 = vmul.f32 %v1766, %v1810
        %v1814 = vmul.f32 %v1767, %v1810
        %v1815 = vmul.f32 %v1768, %v1810
        %v1816 = vmul.f32 %v1769, %v1810
        %v1817 = vmul.f32 %v1770, %v1810
        %v1818 = vmul.f32 %v1771, %v1810
        %v1819 = vmul.f32 %v1772, %v1810
        %v1820 = vmul.f32 %v1773, %v1810
        %v1821 = vmul.f32 %v1774, %v1810
        %v1822 = vmul.f32 %v1775, %v1810
        %v1823 = vmul.f32 %v1776, %v1810
        %v1824 = vmul.f32 %v1777, %v1810
        %v1825 = vmul.f32 %v1778, %v1810
        %v1826 = vmul.f32 %v1779, %v1810
        %v1827 = vmul.f32 %v1780, %v1810
        %v1828 = vmul.f32 %v1781, %v1810
        %v1829 = vmul.f32 %v1782, %v1810
        %v1830 = vmul.f32 %v1783, %v1810
        %v1831 = vmul.f32 %v1784, %v1810
        %v1832 = vmul.f32 %v1785, %v1810
        %v1833 = vmul.f32 %v1786, %v1810
        %v1834 = vmul.f32 %v1787, %v1810
        %v1835 = vmul.f32 %v1788, %v1810
        %v1836 = vmul.f32 %v1789, %v1810
        %v1837 = vmul.f32 %v1790, %v1810
        %v1838 = vmul.f32 %v1791, %v1810
        %v1839 = vmul.f32 %v1792, %v1810
        %v1840 = vmul.f32 %v1793, %v1810
        %v1841 = vmul.f32 %v1794, %v1810
        %v1842 = vmul.f32 %v1795, %v1810
        %v1843 = vmul.f32 %v1796, %v1810
        %v1844 = vmul.f32 %v1797, %v1810
        %v1845 = vmul.f32 %v1798, %v1810
        %v1846 = vmul.f32 %v1799, %v1810
        %v1847 = vmul.f32 %v1800, %v1810
        %v1848 = vmul.f32 %v1801, %v1810
        %v1849 = vmul.f32 %v1802, %v1810
        %v1850 = vmul.f32 %v1803, %v1810
        %v1851 = vmul.f32 %v1804, %v1810
        %v1852 = vld [vmem:[%s7] sm:$0x1]
        %v1854 = vlaneseq
        %v1855 = vshrl.u32 %v1854, 7
        %v1856 = vsub.s32 0, %v1855
        %v1857 = vrot.slane %v1852, %v1856
        %v1859 = vadd.f32 %v1812, %v1857
        %v1860 = vadd.f32 %v1813, %v1857
        %v1861 = vadd.f32 %v1814, %v1857
        %v1862 = vadd.f32 %v1815, %v1857
        %v1863 = vadd.f32 %v1816, %v1857
        %v1864 = vadd.f32 %v1817, %v1857
        %v1865 = vadd.f32 %v1818, %v1857
        %v1866 = vadd.f32 %v1819, %v1857
        %v1867 = vadd.f32 %v1820, %v1857
        %v1868 = vadd.f32 %v1821, %v1857
        %v1869 = vadd.f32 %v1822, %v1857
        %v1870 = vadd.f32 %v1823, %v1857
        %v1871 = vadd.f32 %v1824, %v1857
        %v1872 = vadd.f32 %v1825, %v1857
        %v1873 = vadd.f32 %v1826, %v1857
        %v1874 = vadd.f32 %v1827, %v1857
        %v1875 = vadd.f32 %v1828, %v1857
        %v1876 = vadd.f32 %v1829, %v1857
        %v1877 = vadd.f32 %v1830, %v1857
        %v1878 = vadd.f32 %v1831, %v1857
        %v1879 = vadd.f32 %v1832, %v1857
        %v1880 = vadd.f32 %v1833, %v1857
        %v1881 = vadd.f32 %v1834, %v1857
        %v1882 = vadd.f32 %v1835, %v1857
        %v1883 = vadd.f32 %v1836, %v1857
        %v1884 = vadd.f32 %v1837, %v1857
        %v1885 = vadd.f32 %v1838, %v1857
        %v1886 = vadd.f32 %v1839, %v1857
        %v1887 = vadd.f32 %v1840, %v1857
        %v1888 = vadd.f32 %v1841, %v1857
        %v1889 = vadd.f32 %v1842, %v1857
        %v1890 = vadd.f32 %v1843, %v1857
        %v1891 = vadd.f32 %v1844, %v1857
        %v1892 = vadd.f32 %v1845, %v1857
        %v1893 = vadd.f32 %v1846, %v1857
        %v1894 = vadd.f32 %v1847, %v1857
        %v1895 = vadd.f32 %v1848, %v1857
        %v1896 = vadd.f32 %v1849, %v1857
        %v1897 = vadd.f32 %v1850, %v1857
        %v1898 = vadd.f32 %v1851, %v1857
        %1899 = vst [vmem:[%s323] sm:$0xff] %v1859
        %1900 = vst [vmem:[%s323 + $0x8] sm:$0xff] %v1860
        %1901 = vst [vmem:[%s323 + $0x10] sm:$0xff] %v1861
        %1902 = vst [vmem:[%s323 + $0x18] sm:$0xff] %v1862
        %1903 = vst [vmem:[%s323 + $0x20] sm:$0xff] %v1863
        %1904 = vst [vmem:[%s323 + $0x28] sm:$0xff] %v1864
        %1905 = vst [vmem:[%s323 + $0x30] sm:$0xff] %v1865
        %1906 = vst [vmem:[%s323 + $0x38] sm:$0xff] %v1866
        %1907 = vst [vmem:[%s323 + $0x40] sm:$0xff] %v1867
        %1908 = vst [vmem:[%s323 + $0x48] sm:$0xff] %v1868
        %1909 = vst [vmem:[%s323 + $0x50] sm:$0xff] %v1869
        %1910 = vst [vmem:[%s323 + $0x58] sm:$0xff] %v1870
        %1911 = vst [vmem:[%s323 + $0x60] sm:$0xff] %v1871
        %1912 = vst [vmem:[%s323 + $0x68] sm:$0xff] %v1872
        %1913 = vst [vmem:[%s323 + $0x70] sm:$0xff] %v1873
        %1914 = vst [vmem:[%s323 + $0x78] sm:$0xff] %v1874
        %1915 = vst [vmem:[%s323 + $0x80] sm:$0xff] %v1875
        %1916 = vst [vmem:[%s323 + $0x88] sm:$0xff] %v1876
        %1917 = vst [vmem:[%s323 + $0x90] sm:$0xff] %v1877
        %1918 = vst [vmem:[%s323 + $0x98] sm:$0xff] %v1878
        %1919 = vst [vmem:[%s323 + $0xa0] sm:$0xff] %v1879
        %1920 = vst [vmem:[%s323 + $0xa8] sm:$0xff] %v1880
        %1921 = vst [vmem:[%s323 + $0xb0] sm:$0xff] %v1881
        %1922 = vst [vmem:[%s323 + $0xb8] sm:$0xff] %v1882
        %1923 = vst [vmem:[%s323 + $0xc0] sm:$0xff] %v1883
        %1924 = vst [vmem:[%s323 + $0xc8] sm:$0xff] %v1884
        %1925 = vst [vmem:[%s323 + $0xd0] sm:$0xff] %v1885
        %1926 = vst [vmem:[%s323 + $0xd8] sm:$0xff] %v1886
        %1927 = vst [vmem:[%s323 + $0xe0] sm:$0xff] %v1887
        %1928 = vst [vmem:[%s323 + $0xe8] sm:$0xff] %v1888
        %1929 = vst [vmem:[%s323 + $0xf0] sm:$0xff] %v1889
        %1930 = vst [vmem:[%s323 + $0xf8] sm:$0xff] %v1890
        %1931 = vst [vmem:[%s323 + $0x100] sm:$0xff] %v1891
        %1932 = vst [vmem:[%s323 + $0x108] sm:$0xff] %v1892
        %1933 = vst [vmem:[%s323 + $0x110] sm:$0xff] %v1893
        %1934 = vst [vmem:[%s323 + $0x118] sm:$0xff] %v1894
        %1935 = vst [vmem:[%s323 + $0x120] sm:$0xff] %v1895
        %1936 = vst [vmem:[%s323 + $0x128] sm:$0xff] %v1896
        %1937 = vst [vmem:[%s323 + $0x130] sm:$0xff] %v1897
        %1938 = vst [vmem:[%s323 + $0x138] sm:$0xff] %v1898
        %s1939 = sand.u32 %s206, 1
        %s1940 = scalar_lea.sflag [#allocation4], %s1939
        %s1941 = sand.u32 %s206, 1
        %s1942 = smul.addr %s1941, 320
        %s1943 = scalar_lea.vmem [#allocation5], %s1942
        // Predicated region
        $region57: #{attention_module_pallas.1} parent=51 // pred_check
          %p1944 = pneg %p216
        $region58: #{attention_module_pallas.1} parent=51 // pred_check_branch
          %1946 = sbr.rel (%p1944) target = $region60
        $region59: #{attention_module_pallas.1} parent=51 // pred_region
          %s1948 = ssub.s32 5120, 5120
          %1949 = vsyncadd %s1940, %s1948
          %s1950 = smul.addr %s25, 40
          %s1951 = smul.addr %s1950, 128
          %s1952 = scalar_lea.hbm %s8, %s1951
          %s1953 = sshll.u32 %s1943, 4
          %s1954 = int_to_ptr.vmem [resolvable:$true] %s1953
          %1959 = dma.vmem_to_hbm [thread:$0]  %s1954, 5120, %s1952, %s1940, 128, 128, 8
        $region60: #{attention_module_pallas.1} parent=51 // pred_fallthru
          _
      $region52: #{attention_module_pallas.1} parent=5 // pred_fallthru
        _
      %p1960 = scmp.le.s32.totalorder 2, %s20
      // Predicated region
      $region61: #{attention_module_pallas.1} parent=5 // pred_check
        %p1961 = pneg %p1960
      $region62: #{attention_module_pallas.1} parent=5 // pred_check_branch
        %1963 = sbr.rel (%p1961) target = $region64
      $region63: #{attention_module_pallas.1} parent=5 // pred_region
        %s1964 = ssub.s32 %s20, 2
        // Predicated region
        $region65: #{attention_module_pallas.1} parent=63 // pred_check
          %p1965 = pneg %p222
        $region66: #{attention_module_pallas.1} parent=63 // pred_check_branch
          %1967 = sbr.rel (%p1965) target = $region68
        $region67: #{attention_module_pallas.1} parent=63 // pred_region
          %s1968 = sand.u32 %s207, 1
          %s1969 = scalar_lea.sflag [#allocation4], %s1968
          %s1970 = sand.u32 %s207, 1
          %s1971 = smul.addr %s1970, 320
          %s1972 = scalar_lea.vmem [#allocation5], %s1971
          %1973 = dma.done %s1969, 5120
        $region68: #{attention_module_pallas.1} parent=63 // pred_fallthru
          _
      $region64: #{attention_module_pallas.1} parent=5 // pred_fallthru
        _
    $region6: #{attention_module_pallas.1} parent=1 // loop_footer
      %s24 = sadd.s32 1, %s20
    $region7: #{attention_module_pallas.1} parent=1 // loop_footer_branch
      %19 = sbr.rel target = $region3
    $region8: #{attention_module_pallas.1} parent=1 // loop_exit
      _
    %1974 = vsyncpa [#allocation3], 1
    %s1975 = scalar_lea.sflag [#allocation3], 1
    %1976 = vsyncpa %s1975, 1
    %1977 = vsyncpa [#allocation4], 1
    %s1978 = scalar_lea.sflag [#allocation4], 1
    %1979 = vsyncpa %s1978, 1

</llo_original>
